<compile_context>
chip_gen: v7x
topology: tpu7x:2x2x1
jax: 0.10.0
libtpu: 0.0.40
codegen_flags: <defaults>
</compile_context>

<pallas_src>
import functools
import math

import jax
import jax.numpy as jnp
from jax import lax
from jax.experimental import pallas as pl
from jax.experimental.pallas import tpu as pltpu

_BN_EPS = 1e-5
_COMPUTE_DTYPE = jnp.bfloat16


def _round_up(x, m):
    return (x + m - 1) // m * m


def _conv_out(h, k, s, p):
    return (h + 2 * p - k) // s + 1


def _vmem_limit_bytes():
    # Per-generation scoped-VMEM budget (v5e/v6e: 128 MiB, v7x: 64 MiB per core),
    # raised above the 16-32 MiB default with headroom left for the compiler.
    try:
        cap = int(pltpu.get_tpu_info().vmem_capacity_bytes)
    except Exception:
        cap = 64 * 1024 * 1024
    return int(max(32 * 1024 * 1024, (cap * 3) // 4))


# ----------------------------------------------------------------------------
# Pallas kernels
# ----------------------------------------------------------------------------
def _matmul_bias_relu_kernel(x_ref, w_ref, b_ref, o_ref):
    """o = relu(x @ w + b); BN scale already folded into w (stem conv)."""
    acc = jnp.dot(x_ref[...], w_ref[...], preferred_element_type=jnp.float32)
    o_ref[...] = jnp.maximum(acc + b_ref[...], 0.0).astype(o_ref.dtype)


def _dwpw_block_kernel(x_ref, wdw_ref, bdw_ref, wpw_ref, bpw_ref, o_ref, *,
                       stride, ow):
    """Fused MobileNetV1 block, one output row per grid step.

    x_ref:   (n_phase, Hh, Wh, Cin)  padded, phase-decomposed image, resident in
             VMEM across the whole row axis (index_map is constant in it).
             n_phase = 1 for stride 1, 4 for stride 2 -- every 3x3 tap becomes a
             plain contiguous static slice (no strided VMEM access).
    wdw_ref: (9, Cin)    depthwise weights, BN scale folded, bf16.
    bdw_ref: (1, Cin)    depthwise BN bias, f32.
    wpw_ref: (Cin, Cout) pointwise weights, BN scale folded, bf16.
    bpw_ref: (1, Cout)   pointwise BN bias, f32.
    o_ref:   (1, 1, OW, Cout) output row, bf16.
    """
    h = pl.program_id(1)                              # output row in this image
    wdw = wdw_ref[...].astype(jnp.float32)            # (9, Cin)
    cin = wdw.shape[1]
    acc = jnp.zeros((ow, cin), jnp.float32)           # f32 VPU accumulation
    for kh in range(3):                               # static unroll, 3x3 taps
        if stride == 1:
            rows = (x_ref[0, h + kh].astype(jnp.float32),)
        else:
            a = h + kh // 2
            b = (kh % 2) * 2
            rows = (x_ref[b, a].astype(jnp.float32),
                    x_ref[b + 1, a].astype(jnp.float32))
        for kw in range(3):
            k = kh * 3 + kw
            if stride == 1:
                tap = rows[0][kw:kw + ow, :]
            else:
                tap = rows[kw % 2][kw // 2:kw // 2 + ow, :]
            acc = acc + tap * wdw[k:k + 1, :]
    y = jnp.maximum(acc + bdw_ref[...], 0.0)          # DW + BN + ReLU   (f32)
    pw = jnp.dot(y.astype(wpw_ref.dtype), wpw_ref[...],
                 preferred_element_type=jnp.float32)  # PW 1x1 on the MXU
    pw = jnp.maximum(pw + bpw_ref[...], 0.0)          # PW BN + ReLU     (f32)
    o_ref[0, 0] = pw.astype(o_ref.dtype)


# ----------------------------------------------------------------------------
# Layer wrappers
# ----------------------------------------------------------------------------
def pallas_matmul_bias_relu(x, w, b):
    """x: (M, K) bf16, w: (K, Cout) bf16 (scale folded), b: (1, Cout) f32."""
    M, K = x.shape
    Cout = w.shape[1]
    TM = min(512, _round_up(M, 8))
    Mp = _round_up(M, TM)
    if Mp != M:
        x = jnp.pad(x, ((0, Mp - M), (0, 0)))
    out = pl.pallas_call(
        _matmul_bias_relu_kernel,
        out_shape=jax.ShapeDtypeStruct((Mp, Cout), x.dtype),
        grid=(Mp // TM,),
        in_specs=[
            pl.BlockSpec((TM, K), lambda i: (i, 0)),
            pl.BlockSpec((K, Cout), lambda i: (0, 0)),
            pl.BlockSpec((1, Cout), lambda i: (0, 0)),
        ],
        out_specs=pl.BlockSpec((TM, Cout), lambda i: (i, 0)),
        compiler_params=pltpu.CompilerParams(
            dimension_semantics=("parallel",),
            vmem_limit_bytes=_vmem_limit_bytes()),
    )(x, w, b)
    return out if Mp == M else out[:M]


def stem_conv_bn_relu(x_nhwc, w_mat, bias, *, stride=2, padding=1):
    """Stem: dense 3x3 conv (stride 2) + folded BN + ReLU via im2col + MXU matmul.

    The stem is tiny (Cin=3); the im2col glue here is negligible -- the heavy
    depthwise/pointwise blocks below avoid any tap materialization in HBM.
    """
    N, H, W, Cin = x_nhwc.shape
    Cout = w_mat.shape[1]
    OH = _conv_out(H, 3, stride, padding)
    OW = _conv_out(W, 3, stride, padding)
    xp = jnp.pad(x_nhwc, ((0, 0), (padding, padding), (padding, padding), (0, 0)))
    taps = [xp[:, kh:kh + stride * OH:stride, kw:kw + stride * OW:stride, :]
            for kh in range(3) for kw in range(3)]
    patches = jnp.stack(taps, axis=3).reshape(N * OH * OW, 9 * Cin)
    out = pallas_matmul_bias_relu(patches, w_mat, bias)
    return out.reshape(N, OH, OW, Cout)


def _phase_decompose(xp, stride):
    """Return (N*n_phase, Hh, Wh, C) so every 3x3 tap (for either stride) is a
    contiguous static slice inside the kernel."""
    N, Hp, Wp, C = xp.shape
    if stride == 1:
        return xp, 1, Hp, Wp
    Hp2, Wp2 = Hp + (Hp % 2), Wp + (Wp % 2)
    if (Hp2, Wp2) != (Hp, Wp):
        xp = jnp.pad(xp, ((0, 0), (0, Hp2 - Hp), (0, Wp2 - Wp), (0, 0)))
    Hh, Wh = Hp2 // 2, Wp2 // 2
    x = xp.reshape(N, Hh, 2, Wh, 2, C)
    x = jnp.transpose(x, (0, 2, 4, 1, 3, 5))           # (N, 2, 2, Hh, Wh, C)
    return x.reshape(N * 4, Hh, Wh, C), 4, Hh, Wh


def mobilenet_block_fused(x_nhwc, blk):
    """One MobileNetV1 block = a single fused pallas_call."""
    N, H, W, Cin = x_nhwc.shape
    s, p = blk["stride"], blk["padding"]
    Cout = blk["wpw"].shape[1]
    OH = _conv_out(H, 3, s, p)
    OW = _conv_out(W, 3, s, p)
    xp = jnp.pad(x_nhwc, ((0, 0), (p, p), (p, p), (0, 0)))
    xph, nph, Hh, Wh = _phase_decompose(xp, s)

    kernel = functools.partial(_dwpw_block_kernel, stride=s, ow=OW)
    out = pl.pallas_call(
        kernel,
        out_shape=jax.ShapeDtypeStruct((N, OH, OW, Cout), x_nhwc.dtype),
        grid=(N, OH),
        in_specs=[
            # Whole image resident across the row axis (index_map constant in h).
            pl.BlockSpec((nph, Hh, Wh, Cin), lambda n, h: (n, 0, 0, 0)),
            pl.BlockSpec((9, Cin), lambda n, h: (0, 0)),
            pl.BlockSpec((1, Cin), lambda n, h: (0, 0)),
            pl.BlockSpec((Cin, Cout), lambda n, h: (0, 0)),
            pl.BlockSpec((1, Cout), lambda n, h: (0, 0)),
        ],
        out_specs=pl.BlockSpec((1, 1, OW, Cout), lambda n, h: (n, h, 0, 0)),
        compiler_params=pltpu.CompilerParams(
            dimension_semantics=("parallel", "parallel"),
            vmem_limit_bytes=_vmem_limit_bytes()),
    )(xph, blk["wdw"], blk["bdw"], blk["wpw"], blk["bpw"])
    return out


# ----------------------------------------------------------------------------
# Parameter construction (deterministic, mirrors __init__/init_weights)
# ----------------------------------------------------------------------------
def _kaiming_normal(key, shape):
    # kaiming_normal_(mode='fan_out', nonlinearity='relu') on (out, in/groups, kh, kw)
    fan_out = shape[0] * shape[2] * shape[3]
    std = math.sqrt(2.0 / fan_out)
    return std * jax.random.normal(key, shape, dtype=jnp.float32)


def _bn_fold(c):
    # Fresh BatchNorm2d, eval mode: gamma=1, beta=0, running_mean=0, running_var=1.
    gamma = jnp.ones((c,), jnp.float32)
    beta = jnp.zeros((c,), jnp.float32)
    mean = jnp.zeros((c,), jnp.float32)
    var = jnp.ones((c,), jnp.float32)
    scale = gamma / jnp.sqrt(var + _BN_EPS)
    bias = beta - mean * scale
    return scale, bias


def make_params(key, in_planes, base_planes, layer_planes, strides,
                compute_dtype=_COMPUTE_DTYPE):
    """Kernel-ready params: BN scale folded into conv weights (bf16), f32 biases."""
    assert len(strides) == len(layer_planes)
    params = {}

    key, k = jax.random.split(key)
    w1 = _kaiming_normal(k, (base_planes, in_planes, 3, 3))          # OIHW
    s1, b1 = _bn_fold(base_planes)
    w1_hwio = jnp.transpose(w1, (2, 3, 1, 0)) * s1                   # fold BN scale
    params["stem"] = dict(
        w=w1_hwio.reshape(9 * in_planes, base_planes).astype(compute_dtype),
        b=b1.reshape(1, -1),
    )

    blocks = []
    in_p = base_planes
    layer_num = len(layer_planes)
    padding = 1
    for i, (out_p, stride) in enumerate(zip(layer_planes, strides)):
        if i == layer_num - 1:
            padding = 4
        key, k1, k2 = jax.random.split(key, 3)
        wdw = _kaiming_normal(k1, (in_p, 1, 3, 3))                   # (C,1,3,3)
        sdw, bdw = _bn_fold(in_p)
        w9 = jnp.transpose(wdw[:, 0], (1, 2, 0)).reshape(9, in_p) * sdw
        wpw = _kaiming_normal(k2, (out_p, in_p, 1, 1))               # (Cout,Cin,1,1)
        spw, bpw = _bn_fold(out_p)
        wmat = jnp.transpose(wpw[:, :, 0, 0]) * spw[None, :]         # (Cin, Cout)
        blocks.append(dict(
            wdw=w9.astype(compute_dtype), bdw=bdw.reshape(1, -1),
            wpw=wmat.astype(compute_dtype), bpw=bpw.reshape(1, -1),
            stride=int(stride), padding=int(padding)))
        in_p = out_p
    params["blocks"] = blocks
    return params


# ----------------------------------------------------------------------------
# Backbone forward (NCHW in / NCHW out, like PyTorch)
# ----------------------------------------------------------------------------
def mobilenetv1_backbone_forward(x_nchw, params):
    x = jnp.transpose(x_nchw, (0, 2, 3, 1)).astype(_COMPUTE_DTYPE)   # NCHW -> NHWC
    x = stem_conv_bn_relu(x, params["stem"]["w"], params["stem"]["b"],
                          stride=2, padding=1)
    for blk in params["blocks"]:
        x = mobilenet_block_fused(x, blk)
    return jnp.transpose(x, (0, 3, 1, 2)).astype(jnp.float32)        # NHWC -> NCHW


# ----------------------------------------------------------------------------
# Pure-JAX reference (lax convolutions), consuming the SAME folded bf16 params
# ----------------------------------------------------------------------------
def _ref_forward(x_nchw, params):
    dn = ("NHWC", "HWIO", "NHWC")
    x = jnp.transpose(x_nchw, (0, 2, 3, 1)).astype(_COMPUTE_DTYPE)

    cin = x.shape[-1]
    w_hwio = params["stem"]["w"].reshape(3, 3, cin, -1)
    y = lax.conv_general_dilated(x, w_hwio, (2, 2), [(1, 1), (1, 1)],
                                 dimension_numbers=dn,
                                 preferred_element_type=jnp.float32)
    y = jnp.maximum(y + params["stem"]["b"], 0.0).astype(_COMPUTE_DTYPE)

    for blk in params["blocks"]:
        c = blk["wdw"].shape[1]
        s, p = blk["stride"], blk["padding"]
        wd = blk["wdw"].reshape(3, 3, 1, c)
        y = lax.conv_general_dilated(y, wd, (s, s), [(p, p), (p, p)],
                                     dimension_numbers=dn, feature_group_count=c,
                                     preferred_element_type=jnp.float32)
        y = jnp.maximum(y + blk["bdw"], 0.0).astype(_COMPUTE_DTYPE)
        wp = blk["wpw"][None, None]                                  # (1,1,Cin,Cout)
        y = lax.conv_general_dilated(y, wp, (1, 1), [(0, 0), (0, 0)],
                                     dimension_numbers=dn,
                                     preferred_element_type=jnp.float32)
        y = jnp.maximum(y + blk["bpw"], 0.0).astype(_COMPUTE_DTYPE)
    return jnp.transpose(y, (0, 3, 1, 2)).astype(jnp.float32)


# ----------------------------------------------------------------------------
if __name__ == "__main__":
    # Small config consistent with the module (same structure, reduced widths/depth).
    in_planes = 3
    base_planes = 8
    layer_planes = (16, 32, 32, 64)
    strides = (1, 2, 1, 2)

    key = jax.random.PRNGKey(0)
    key, kx = jax.random.split(key)
    x = jax.random.normal(kx, (2, in_planes, 16, 16), dtype=jnp.float32)  # NCHW

    params = make_params(key, in_planes, base_planes, layer_planes, strides)

    fwd = jax.jit(lambda inp: mobilenetv1_backbone_forward(inp, params))
    out = jax.block_until_ready(fwd(x))

    ref = jax.block_until_ready(_ref_forward(x, params))
    assert out.shape == ref.shape, (out.shape, ref.shape)
    max_err = float(jnp.max(jnp.abs(out - ref)))
    assert jnp.allclose(out, ref, rtol=2e-2, atol=2e-2), max_err

    print("KERNEL_OK")
</pallas_src>

<mosaic_0001>
module attributes {stable_mosaic.version = 11 : i64} {
  func.func @_matmul_bias_relu_kernel(%arg0: i32, %arg1: memref<128x27xbf16, #tpu.memory_space<vmem>>, %arg2: memref<27x8xbf16, #tpu.memory_space<vmem>>, %arg3: memref<1x8xf32, #tpu.memory_space<vmem>>, %arg4: memref<128x8xbf16, #tpu.memory_space<vmem>>) attributes {dimension_semantics = [#tpu.dimension_semantics<parallel>], iteration_bounds = array<i64: 1>, scalar_prefetch = 0 : i64, scratch_operands = 0 : i64, tpu.core_type = #tpu.core_type<tc>, window_params = [{transform_indices = @transform_0, window_bounds = array<i64: 128, 27>}, {pipeline_mode = #tpu.pipeline_mode<synchronous>, transform_indices = @transform_1, window_bounds = array<i64: 27, 8>}, {pipeline_mode = #tpu.pipeline_mode<synchronous>, transform_indices = @transform_2, window_bounds = array<i64: 1, 8>}, {transform_indices = @transform_3, window_bounds = array<i64: 128, 8>}]} {
    %c0 = arith.constant 0 : index
    %c0_0 = arith.constant 0 : index
    %0 = vector.load %arg1[%c0, %c0_0] : memref<128x27xbf16, #tpu.memory_space<vmem>>, vector<128x27xbf16>
    %c0_1 = arith.constant 0 : index
    %c0_2 = arith.constant 0 : index
    %1 = vector.load %arg2[%c0_1, %c0_2] : memref<27x8xbf16, #tpu.memory_space<vmem>>, vector<27x8xbf16>
    %cst = arith.constant dense<0.000000e+00> : vector<128x8xf32>
    %2 = tpu.matmul %0, %1, %cst {dimension_numbers = #tpu.dot_dimension_numbers<[1], [0], [0], [1], [0, 0, 1, 1], [], []>} : vector<128x27xbf16>, vector<27x8xbf16>, vector<128x8xf32> -> vector<128x8xf32>
    %c0_3 = arith.constant 0 : index
    %c0_4 = arith.constant 0 : index
    %3 = vector.load %arg3[%c0_3, %c0_4] : memref<1x8xf32, #tpu.memory_space<vmem>>, vector<1x8xf32>
    %4 = vector.broadcast %3 : vector<1x8xf32> to vector<128x8xf32>
    %5 = arith.addf %2, %4 : vector<128x8xf32>
    %cst_5 = arith.constant 0.000000e+00 : f32
    %6 = vector.broadcast %cst_5 : f32 to vector<128x8xf32>
    %7 = arith.maximumf %5, %6 : vector<128x8xf32>
    %8 = arith.truncf %7 : vector<128x8xf32> to vector<128x8xbf16>
    %c0_6 = arith.constant 0 : index
    %c0_7 = arith.constant 0 : index
    %9 = vector.load %arg4[%c0_6, %c0_7] : memref<128x8xbf16, #tpu.memory_space<vmem>>, vector<128x8xbf16>
    tpu.vector_store %arg4[%c0_6, %c0_7], %8 {strides = array<i32>} : memref<128x8xbf16, #tpu.memory_space<vmem>>, vector<128x8xbf16>,
    return
  }
  func.func @transform_0(%arg0: i32) -> (i32, i32) {
    %c0_i32 = arith.constant 0 : i32
    %c0_i32_0 = arith.constant 0 : i32
    return %arg0, %c0_i32 : i32, i32
  }
  func.func @transform_1(%arg0: i32) -> (i32, i32) {
    %c0_i32 = arith.constant 0 : i32
    %c0_i32_0 = arith.constant 0 : i32
    %c0_i32_1 = arith.constant 0 : i32
    return %c0_i32, %c0_i32_0 : i32, i32
  }
  func.func @transform_2(%arg0: i32) -> (i32, i32) {
    %c0_i32 = arith.constant 0 : i32
    %c0_i32_0 = arith.constant 0 : i32
    %c0_i32_1 = arith.constant 0 : i32
    return %c0_i32, %c0_i32_0 : i32, i32
  }
  func.func @transform_3(%arg0: i32) -> (i32, i32) {
    %c0_i32 = arith.constant 0 : i32
    %c0_i32_0 = arith.constant 0 : i32
    return %arg0, %c0_i32 : i32, i32
  }
}

module attributes {stable_mosaic.version = 11 : i64} {
  func.func @_dwpw_block_kernel(%arg0: i32, %arg1: i32, %arg2: memref<1x10x10x8xbf16, #tpu.memory_space<vmem>>, %arg3: memref<9x8xbf16, #tpu.memory_space<vmem>>, %arg4: memref<1x8xf32, #tpu.memory_space<vmem>>, %arg5: memref<8x16xbf16, #tpu.memory_space<vmem>>, %arg6: memref<1x16xf32, #tpu.memory_space<vmem>>, %arg7: memref<1x1x8x16xbf16, #tpu.memory_space<vmem>>) attributes {dimension_semantics = [#tpu.dimension_semantics<parallel>, #tpu.dimension_semantics<parallel>], iteration_bounds = array<i64: 2, 8>, scalar_prefetch = 0 : i64, scratch_operands = 0 : i64, tpu.core_type = #tpu.core_type<tc>, window_params = [{transform_indices = @transform_0, window_bounds = array<i64: 1, 10, 10, 8>}, {pipeline_mode = #tpu.pipeline_mode<synchronous>, transform_indices = @transform_1, window_bounds = array<i64: 9, 8>}, {pipeline_mode = #tpu.pipeline_mode<synchronous>, transform_indices = @transform_2, window_bounds = array<i64: 1, 8>}, {pipeline_mode = #tpu.pipeline_mode<synchronous>, transform_indices = @transform_3, window_bounds = array<i64: 8, 16>}, {pipeline_mode = #tpu.pipeline_mode<synchronous>, transform_indices = @transform_4, window_bounds = array<i64: 1, 16>}, {transform_indices = @transform_5, window_bounds = array<i64: 1, 1, 8, 16>}]} {
    %c0 = arith.constant 0 : index
    %c0_0 = arith.constant 0 : index
    %0 = vector.load %arg3[%c0, %c0_0] : memref<9x8xbf16, #tpu.memory_space<vmem>>, vector<9x8xbf16>
    %1 = arith.extf %0 : vector<9x8xbf16> to vector<9x8xf32>
    %cst = arith.constant 0.000000e+00 : f32
    %2 = vector.broadcast %cst : f32 to vector<8x8xf32>
    %c0_i32 = arith.constant 0 : i32
    %3 = arith.addi %arg1, %c0_i32 : i32
    %c0_1 = arith.constant 0 : index
    %4 = arith.index_cast %3 : i32 to index
    %c0_2 = arith.constant 0 : index
    %c0_3 = arith.constant 0 : index
    %5 = vector.load %arg2[%c0_1, %4, %c0_2, %c0_3] : memref<1x10x10x8xbf16, #tpu.memory_space<vmem>>, vector<1x1x10x8xbf16>
    %6 = vector.shape_cast %5 : vector<1x1x10x8xbf16> to vector<10x8xbf16>
    %7 = arith.extf %6 : vector<10x8xbf16> to vector<10x8xf32>
    %8 = vector.extract_strided_slice %7 {offsets = [0, 0], sizes = [8, 8], strides = [1, 1]} : vector<10x8xf32> to vector<8x8xf32>
    %9 = vector.extract_strided_slice %1 {offsets = [0, 0], sizes = [1, 8], strides = [1, 1]} : vector<9x8xf32> to vector<1x8xf32>
    %10 = vector.broadcast %9 : vector<1x8xf32> to vector<8x8xf32>
    %11 = arith.mulf %8, %10 : vector<8x8xf32>
    %12 = arith.addf %2, %11 : vector<8x8xf32>
    %13 = vector.extract_strided_slice %7 {offsets = [1, 0], sizes = [8, 8], strides = [1, 1]} : vector<10x8xf32> to vector<8x8xf32>
    %14 = vector.extract_strided_slice %1 {offsets = [1, 0], sizes = [1, 8], strides = [1, 1]} : vector<9x8xf32> to vector<1x8xf32>
    %15 = vector.broadcast %14 : vector<1x8xf32> to vector<8x8xf32>
    %16 = arith.mulf %13, %15 : vector<8x8xf32>
    %17 = arith.addf %12, %16 : vector<8x8xf32>
    %18 = vector.extract_strided_slice %7 {offsets = [2, 0], sizes = [8, 8], strides = [1, 1]} : vector<10x8xf32> to vector<8x8xf32>
    %19 = vector.extract_strided_slice %1 {offsets = [2, 0], sizes = [1, 8], strides = [1, 1]} : vector<9x8xf32> to vector<1x8xf32>
    %20 = vector.broadcast %19 : vector<1x8xf32> to vector<8x8xf32>
    %21 = arith.mulf %18, %20 : vector<8x8xf32>
    %22 = arith.addf %17, %21 : vector<8x8xf32>
    %c1_i32 = arith.constant 1 : i32
    %23 = arith.addi %arg1, %c1_i32 : i32
    %c0_4 = arith.constant 0 : index
    %24 = arith.index_cast %23 : i32 to index
    %c0_5 = arith.constant 0 : index
    %c0_6 = arith.constant 0 : index
    %25 = vector.load %arg2[%c0_4, %24, %c0_5, %c0_6] : memref<1x10x10x8xbf16, #tpu.memory_space<vmem>>, vector<1x1x10x8xbf16>
    %26 = vector.shape_cast %25 : vector<1x1x10x8xbf16> to vector<10x8xbf16>
    %27 = arith.extf %26 : vector<10x8xbf16> to vector<10x8xf32>
    %28 = vector.extract_strided_slice %27 {offsets = [0, 0], sizes = [8, 8], strides = [1, 1]} : vector<10x8xf32> to vector<8x8xf32>
    %29 = vector.extract_strided_slice %1 {offsets = [3, 0], sizes = [1, 8], strides = [1, 1]} : vector<9x8xf32> to vector<1x8xf32>
    %30 = vector.broadcast %29 : vector<1x8xf32> to vector<8x8xf32>
    %31 = arith.mulf %28, %30 : vector<8x8xf32>
    %32 = arith.addf %22, %31 : vector<8x8xf32>
    %33 = vector.extract_strided_slice %27 {offsets = [1, 0], sizes = [8, 8], strides = [1, 1]} : vector<10x8xf32> to vector<8x8xf32>
    %34 = vector.extract_strided_slice %1 {offsets = [4, 0], sizes = [1, 8], strides = [1, 1]} : vector<9x8xf32> to vector<1x8xf32>
    %35 = vector.broadcast %34 : vector<1x8xf32> to vector<8x8xf32>
    %36 = arith.mulf %33, %35 : vector<8x8xf32>
    %37 = arith.addf %32, %36 : vector<8x8xf32>
    %38 = vector.extract_strided_slice %27 {offsets = [2, 0], sizes = [8, 8], strides = [1, 1]} : vector<10x8xf32> to vector<8x8xf32>
    %39 = vector.extract_strided_slice %1 {offsets = [5, 0], sizes = [1, 8], strides = [1, 1]} : vector<9x8xf32> to vector<1x8xf32>
    %40 = vector.broadcast %39 : vector<1x8xf32> to vector<8x8xf32>
    %41 = arith.mulf %38, %40 : vector<8x8xf32>
    %42 = arith.addf %37, %41 : vector<8x8xf32>
    %c2_i32 = arith.constant 2 : i32
    %43 = arith.addi %arg1, %c2_i32 : i32
    %c0_7 = arith.constant 0 : index
    %44 = arith.index_cast %43 : i32 to index
    %c0_8 = arith.constant 0 : index
    %c0_9 = arith.constant 0 : index
    %45 = vector.load %arg2[%c0_7, %44, %c0_8, %c0_9] : memref<1x10x10x8xbf16, #tpu.memory_space<vmem>>, vector<1x1x10x8xbf16>
    %46 = vector.shape_cast %45 : vector<1x1x10x8xbf16> to vector<10x8xbf16>
    %47 = arith.extf %46 : vector<10x8xbf16> to vector<10x8xf32>
    %48 = vector.extract_strided_slice %47 {offsets = [0, 0], sizes = [8, 8], strides = [1, 1]} : vector<10x8xf32> to vector<8x8xf32>
    %49 = vector.extract_strided_slice %1 {offsets = [6, 0], sizes = [1, 8], strides = [1, 1]} : vector<9x8xf32> to vector<1x8xf32>
    %50 = vector.broadcast %49 : vector<1x8xf32> to vector<8x8xf32>
    %51 = arith.mulf %48, %50 : vector<8x8xf32>
    %52 = arith.addf %42, %51 : vector<8x8xf32>
    %53 = vector.extract_strided_slice %47 {offsets = [1, 0], sizes = [8, 8], strides = [1, 1]} : vector<10x8xf32> to vector<8x8xf32>
    %54 = vector.extract_strided_slice %1 {offsets = [7, 0], sizes = [1, 8], strides = [1, 1]} : vector<9x8xf32> to vector<1x8xf32>
    %55 = vector.broadcast %54 : vector<1x8xf32> to vector<8x8xf32>
    %56 = arith.mulf %53, %55 : vector<8x8xf32>
    %57 = arith.addf %52, %56 : vector<8x8xf32>
    %58 = vector.extract_strided_slice %47 {offsets = [2, 0], sizes = [8, 8], strides = [1, 1]} : vector<10x8xf32> to vector<8x8xf32>
    %59 = vector.extract_strided_slice %1 {offsets = [8, 0], sizes = [1, 8], strides = [1, 1]} : vector<9x8xf32> to vector<1x8xf32>
    %60 = vector.broadcast %59 : vector<1x8xf32> to vector<8x8xf32>
    %61 = arith.mulf %58, %60 : vector<8x8xf32>
    %62 = arith.addf %57, %61 : vector<8x8xf32>
    %c0_10 = arith.constant 0 : index
    %c0_11 = arith.constant 0 : index
    %63 = vector.load %arg4[%c0_10, %c0_11] : memref<1x8xf32, #tpu.memory_space<vmem>>, vector<1x8xf32>
    %64 = vector.broadcast %63 : vector<1x8xf32> to vector<8x8xf32>
    %65 = arith.addf %62, %64 : vector<8x8xf32>
    %cst_12 = arith.constant 0.000000e+00 : f32
    %66 = vector.broadcast %cst_12 : f32 to vector<8x8xf32>
    %67 = arith.maximumf %65, %66 : vector<8x8xf32>
    %68 = arith.truncf %67 : vector<8x8xf32> to vector<8x8xbf16>
    %c0_13 = arith.constant 0 : index
    %c0_14 = arith.constant 0 : index
    %69 = vector.load %arg5[%c0_13, %c0_14] : memref<8x16xbf16, #tpu.memory_space<vmem>>, vector<8x16xbf16>
    %cst_15 = arith.constant dense<0.000000e+00> : vector<8x16xf32>
    %70 = tpu.matmul %68, %69, %cst_15 {dimension_numbers = #tpu.dot_dimension_numbers<[1], [0], [0], [1], [0, 0, 1, 1], [], []>} : vector<8x8xbf16>, vector<8x16xbf16>, vector<8x16xf32> -> vector<8x16xf32>
    %c0_16 = arith.constant 0 : index
    %c0_17 = arith.constant 0 : index
    %71 = vector.load %arg6[%c0_16, %c0_17] : memref<1x16xf32, #tpu.memory_space<vmem>>, vector<1x16xf32>
    %72 = vector.broadcast %71 : vector<1x16xf32> to vector<8x16xf32>
    %73 = arith.addf %70, %72 : vector<8x16xf32>
    %cst_18 = arith.constant 0.000000e+00 : f32
    %74 = vector.broadcast %cst_18 : f32 to vector<8x16xf32>
    %75 = arith.maximumf %73, %74 : vector<8x16xf32>
    %76 = arith.truncf %75 : vector<8x16xf32> to vector<8x16xbf16>
    %c0_19 = arith.constant 0 : index
    %c0_20 = arith.constant 0 : index
    %c0_21 = arith.constant 0 : index
    %c0_22 = arith.constant 0 : index
    %77 = vector.load %arg7[%c0_19, %c0_20, %c0_21, %c0_22] : memref<1x1x8x16xbf16, #tpu.memory_space<vmem>>, vector<1x1x8x16xbf16>
    %78 = vector.shape_cast %77 : vector<1x1x8x16xbf16> to vector<8x16xbf16>
    %79 = vector.shape_cast %76 : vector<8x16xbf16> to vector<1x1x8x16xbf16>
    tpu.vector_store %arg7[%c0_19, %c0_20, %c0_21, %c0_22], %79 {strides = array<i32>} : memref<1x1x8x16xbf16, #tpu.memory_space<vmem>>, vector<1x1x8x16xbf16>,
    return
  }
  func.func @transform_0(%arg0: i32, %arg1: i32) -> (i32, i32, i32, i32) {
    %c0_i32 = arith.constant 0 : i32
    %c0_i32_0 = arith.constant 0 : i32
    %c0_i32_1 = arith.constant 0 : i32
    %c0_i32_2 = arith.constant 0 : i32
    return %arg0, %c0_i32, %c0_i32_0, %c0_i32_1 : i32, i32, i32, i32
  }
  func.func @transform_1(%arg0: i32, %arg1: i32) -> (i32, i32) {
    %c0_i32 = arith.constant 0 : i32
    %c0_i32_0 = arith.constant 0 : i32
    %c0_i32_1 = arith.constant 0 : i32
    return %c0_i32, %c0_i32_0 : i32, i32
  }
  func.func @transform_2(%arg0: i32, %arg1: i32) -> (i32, i32) {
    %c0_i32 = arith.constant 0 : i32
    %c0_i32_0 = arith.constant 0 : i32
    %c0_i32_1 = arith.constant 0 : i32
    return %c0_i32, %c0_i32_0 : i32, i32
  }
  func.func @transform_3(%arg0: i32, %arg1: i32) -> (i32, i32) {
    %c0_i32 = arith.constant 0 : i32
    %c0_i32_0 = arith.constant 0 : i32
    %c0_i32_1 = arith.constant 0 : i32
    return %c0_i32, %c0_i32_0 : i32, i32
  }
  func.func @transform_4(%arg0: i32, %arg1: i32) -> (i32, i32) {
    %c0_i32 = arith.constant 0 : i32
    %c0_i32_0 = arith.constant 0 : i32
    %c0_i32_1 = arith.constant 0 : i32
    return %c0_i32, %c0_i32_0 : i32, i32
  }
  func.func @transform_5(%arg0: i32, %arg1: i32) -> (i32, i32, i32, i32) {
    %c0_i32 = arith.constant 0 : i32
    %c0_i32_0 = arith.constant 0 : i32
    %c0_i32_1 = arith.constant 0 : i32
    return %arg0, %arg1, %c0_i32, %c0_i32_0 : i32, i32, i32, i32
  }
}

module attributes {stable_mosaic.version = 11 : i64} {
  func.func @_dwpw_block_kernel(%arg0: i32, %arg1: i32, %arg2: memref<4x5x5x16xbf16, #tpu.memory_space<vmem>>, %arg3: memref<9x16xbf16, #tpu.memory_space<vmem>>, %arg4: memref<1x16xf32, #tpu.memory_space<vmem>>, %arg5: memref<16x32xbf16, #tpu.memory_space<vmem>>, %arg6: memref<1x32xf32, #tpu.memory_space<vmem>>, %arg7: memref<1x1x4x32xbf16, #tpu.memory_space<vmem>>) attributes {dimension_semantics = [#tpu.dimension_semantics<parallel>, #tpu.dimension_semantics<parallel>], iteration_bounds = array<i64: 2, 4>, scalar_prefetch = 0 : i64, scratch_operands = 0 : i64, tpu.core_type = #tpu.core_type<tc>, window_params = [{transform_indices = @transform_0, window_bounds = array<i64: 4, 5, 5, 16>}, {pipeline_mode = #tpu.pipeline_mode<synchronous>, transform_indices = @transform_1, window_bounds = array<i64: 9, 16>}, {pipeline_mode = #tpu.pipeline_mode<synchronous>, transform_indices = @transform_2, window_bounds = array<i64: 1, 16>}, {pipeline_mode = #tpu.pipeline_mode<synchronous>, transform_indices = @transform_3, window_bounds = array<i64: 16, 32>}, {pipeline_mode = #tpu.pipeline_mode<synchronous>, transform_indices = @transform_4, window_bounds = array<i64: 1, 32>}, {transform_indices = @transform_5, window_bounds = array<i64: 1, 1, 4, 32>}]} {
    %c0 = arith.constant 0 : index
    %c0_0 = arith.constant 0 : index
    %0 = vector.load %arg3[%c0, %c0_0] : memref<9x16xbf16, #tpu.memory_space<vmem>>, vector<9x16xbf16>
    %1 = arith.extf %0 : vector<9x16xbf16> to vector<9x16xf32>
    %cst = arith.constant 0.000000e+00 : f32
    %2 = vector.broadcast %cst : f32 to vector<4x16xf32>
    %c0_i32 = arith.constant 0 : i32
    %3 = arith.addi %arg1, %c0_i32 : i32
    %c0_1 = arith.constant 0 : index
    %4 = arith.index_cast %3 : i32 to index
    %c0_2 = arith.constant 0 : index
    %c0_3 = arith.constant 0 : index
    %5 = vector.load %arg2[%c0_1, %4, %c0_2, %c0_3] : memref<4x5x5x16xbf16, #tpu.memory_space<vmem>>, vector<1x1x5x16xbf16>
    %6 = vector.shape_cast %5 : vector<1x1x5x16xbf16> to vector<5x16xbf16>
    %7 = arith.extf %6 : vector<5x16xbf16> to vector<5x16xf32>
    %c1 = arith.constant 1 : index
    %8 = arith.index_cast %3 : i32 to index
    %c0_4 = arith.constant 0 : index
    %c0_5 = arith.constant 0 : index
    %9 = vector.load %arg2[%c1, %8, %c0_4, %c0_5] : memref<4x5x5x16xbf16, #tpu.memory_space<vmem>>, vector<1x1x5x16xbf16>
    %10 = vector.shape_cast %9 : vector<1x1x5x16xbf16> to vector<5x16xbf16>
    %11 = arith.extf %10 : vector<5x16xbf16> to vector<5x16xf32>
    %12 = vector.extract_strided_slice %7 {offsets = [0, 0], sizes = [4, 16], strides = [1, 1]} : vector<5x16xf32> to vector<4x16xf32>
    %13 = vector.extract_strided_slice %1 {offsets = [0, 0], sizes = [1, 16], strides = [1, 1]} : vector<9x16xf32> to vector<1x16xf32>
    %14 = vector.broadcast %13 : vector<1x16xf32> to vector<4x16xf32>
    %15 = arith.mulf %12, %14 : vector<4x16xf32>
    %16 = arith.addf %2, %15 : vector<4x16xf32>
    %17 = vector.extract_strided_slice %11 {offsets = [0, 0], sizes = [4, 16], strides = [1, 1]} : vector<5x16xf32> to vector<4x16xf32>
    %18 = vector.extract_strided_slice %1 {offsets = [1, 0], sizes = [1, 16], strides = [1, 1]} : vector<9x16xf32> to vector<1x16xf32>
    %19 = vector.broadcast %18 : vector<1x16xf32> to vector<4x16xf32>
    %20 = arith.mulf %17, %19 : vector<4x16xf32>
    %21 = arith.addf %16, %20 : vector<4x16xf32>
    %22 = vector.extract_strided_slice %7 {offsets = [1, 0], sizes = [4, 16], strides = [1, 1]} : vector<5x16xf32> to vector<4x16xf32>
    %23 = vector.extract_strided_slice %1 {offsets = [2, 0], sizes = [1, 16], strides = [1, 1]} : vector<9x16xf32> to vector<1x16xf32>
    %24 = vector.broadcast %23 : vector<1x16xf32> to vector<4x16xf32>
    %25 = arith.mulf %22, %24 : vector<4x16xf32>
    %26 = arith.addf %21, %25 : vector<4x16xf32>
    %c0_i32_6 = arith.constant 0 : i32
    %27 = arith.addi %arg1, %c0_i32_6 : i32
    %c2 = arith.constant 2 : index
    %28 = arith.index_cast %27 : i32 to index
    %c0_7 = arith.constant 0 : index
    %c0_8 = arith.constant 0 : index
    %29 = vector.load %arg2[%c2, %28, %c0_7, %c0_8] : memref<4x5x5x16xbf16, #tpu.memory_space<vmem>>, vector<1x1x5x16xbf16>
    %30 = vector.shape_cast %29 : vector<1x1x5x16xbf16> to vector<5x16xbf16>
    %31 = arith.extf %30 : vector<5x16xbf16> to vector<5x16xf32>
    %c3 = arith.constant 3 : index
    %32 = arith.index_cast %27 : i32 to index
    %c0_9 = arith.constant 0 : index
    %c0_10 = arith.constant 0 : index
    %33 = vector.load %arg2[%c3, %32, %c0_9, %c0_10] : memref<4x5x5x16xbf16, #tpu.memory_space<vmem>>, vector<1x1x5x16xbf16>
    %34 = vector.shape_cast %33 : vector<1x1x5x16xbf16> to vector<5x16xbf16>
    %35 = arith.extf %34 : vector<5x16xbf16> to vector<5x16xf32>
    %36 = vector.extract_strided_slice %31 {offsets = [0, 0], sizes = [4, 16], strides = [1, 1]} : vector<5x16xf32> to vector<4x16xf32>
    %37 = vector.extract_strided_slice %1 {offsets = [3, 0], sizes = [1, 16], strides = [1, 1]} : vector<9x16xf32> to vector<1x16xf32>
    %38 = vector.broadcast %37 : vector<1x16xf32> to vector<4x16xf32>
    %39 = arith.mulf %36, %38 : vector<4x16xf32>
    %40 = arith.addf %26, %39 : vector<4x16xf32>
    %41 = vector.extract_strided_slice %35 {offsets = [0, 0], sizes = [4, 16], strides = [1, 1]} : vector<5x16xf32> to vector<4x16xf32>
    %42 = vector.extract_strided_slice %1 {offsets = [4, 0], sizes = [1, 16], strides = [1, 1]} : vector<9x16xf32> to vector<1x16xf32>
    %43 = vector.broadcast %42 : vector<1x16xf32> to vector<4x16xf32>
    %44 = arith.mulf %41, %43 : vector<4x16xf32>
    %45 = arith.addf %40, %44 : vector<4x16xf32>
    %46 = vector.extract_strided_slice %31 {offsets = [1, 0], sizes = [4, 16], strides = [1, 1]} : vector<5x16xf32> to vector<4x16xf32>
    %47 = vector.extract_strided_slice %1 {offsets = [5, 0], sizes = [1, 16], strides = [1, 1]} : vector<9x16xf32> to vector<1x16xf32>
    %48 = vector.broadcast %47 : vector<1x16xf32> to vector<4x16xf32>
    %49 = arith.mulf %46, %48 : vector<4x16xf32>
    %50 = arith.addf %45, %49 : vector<4x16xf32>
    %c1_i32 = arith.constant 1 : i32
    %51 = arith.addi %arg1, %c1_i32 : i32
    %c0_11 = arith.constant 0 : index
    %52 = arith.index_cast %51 : i32 to index
    %c0_12 = arith.constant 0 : index
    %c0_13 = arith.constant 0 : index
    %53 = vector.load %arg2[%c0_11, %52, %c0_12, %c0_13] : memref<4x5x5x16xbf16, #tpu.memory_space<vmem>>, vector<1x1x5x16xbf16>
    %54 = vector.shape_cast %53 : vector<1x1x5x16xbf16> to vector<5x16xbf16>
    %55 = arith.extf %54 : vector<5x16xbf16> to vector<5x16xf32>
    %c1_14 = arith.constant 1 : index
    %56 = arith.index_cast %51 : i32 to index
    %c0_15 = arith.constant 0 : index
    %c0_16 = arith.constant 0 : index
    %57 = vector.load %arg2[%c1_14, %56, %c0_15, %c0_16] : memref<4x5x5x16xbf16, #tpu.memory_space<vmem>>, vector<1x1x5x16xbf16>
    %58 = vector.shape_cast %57 : vector<1x1x5x16xbf16> to vector<5x16xbf16>
    %59 = arith.extf %58 : vector<5x16xbf16> to vector<5x16xf32>
    %60 = vector.extract_strided_slice %55 {offsets = [0, 0], sizes = [4, 16], strides = [1, 1]} : vector<5x16xf32> to vector<4x16xf32>
    %61 = vector.extract_strided_slice %1 {offsets = [6, 0], sizes = [1, 16], strides = [1, 1]} : vector<9x16xf32> to vector<1x16xf32>
    %62 = vector.broadcast %61 : vector<1x16xf32> to vector<4x16xf32>
    %63 = arith.mulf %60, %62 : vector<4x16xf32>
    %64 = arith.addf %50, %63 : vector<4x16xf32>
    %65 = vector.extract_strided_slice %59 {offsets = [0, 0], sizes = [4, 16], strides = [1, 1]} : vector<5x16xf32> to vector<4x16xf32>
    %66 = vector.extract_strided_slice %1 {offsets = [7, 0], sizes = [1, 16], strides = [1, 1]} : vector<9x16xf32> to vector<1x16xf32>
    %67 = vector.broadcast %66 : vector<1x16xf32> to vector<4x16xf32>
    %68 = arith.mulf %65, %67 : vector<4x16xf32>
    %69 = arith.addf %64, %68 : vector<4x16xf32>
    %70 = vector.extract_strided_slice %55 {offsets = [1, 0], sizes = [4, 16], strides = [1, 1]} : vector<5x16xf32> to vector<4x16xf32>
    %71 = vector.extract_strided_slice %1 {offsets = [8, 0], sizes = [1, 16], strides = [1, 1]} : vector<9x16xf32> to vector<1x16xf32>
    %72 = vector.broadcast %71 : vector<1x16xf32> to vector<4x16xf32>
    %73 = arith.mulf %70, %72 : vector<4x16xf32>
    %74 = arith.addf %69, %73 : vector<4x16xf32>
    %c0_17 = arith.constant 0 : index
    %c0_18 = arith.constant 0 : index
    %75 = vector.load %arg4[%c0_17, %c0_18] : memref<1x16xf32, #tpu.memory_space<vmem>>, vector<1x16xf32>
    %76 = vector.broadcast %75 : vector<1x16xf32> to vector<4x16xf32>
    %77 = arith.addf %74, %76 : vector<4x16xf32>
    %cst_19 = arith.constant 0.000000e+00 : f32
    %78 = vector.broadcast %cst_19 : f32 to vector<4x16xf32>
    %79 = arith.maximumf %77, %78 : vector<4x16xf32>
    %80 = arith.truncf %79 : vector<4x16xf32> to vector<4x16xbf16>
    %c0_20 = arith.constant 0 : index
    %c0_21 = arith.constant 0 : index
    %81 = vector.load %arg5[%c0_20, %c0_21] : memref<16x32xbf16, #tpu.memory_space<vmem>>, vector<16x32xbf16>
    %cst_22 = arith.constant dense<0.000000e+00> : vector<4x32xf32>
    %82 = tpu.matmul %80, %81, %cst_22 {dimension_numbers = #tpu.dot_dimension_numbers<[1], [0], [0], [1], [0, 0, 1, 1], [], []>} : vector<4x16xbf16>, vector<16x32xbf16>, vector<4x32xf32> -> vector<4x32xf32>
    %c0_23 = arith.constant 0 : index
    %c0_24 = arith.constant 0 : index
    %83 = vector.load %arg6[%c0_23, %c0_24] : memref<1x32xf32, #tpu.memory_space<vmem>>, vector<1x32xf32>
    %84 = vector.broadcast %83 : vector<1x32xf32> to vector<4x32xf32>
    %85 = arith.addf %82, %84 : vector<4x32xf32>
    %cst_25 = arith.constant 0.000000e+00 : f32
    %86 = vector.broadcast %cst_25 : f32 to vector<4x32xf32>
    %87 = arith.maximumf %85, %86 : vector<4x32xf32>
    %88 = arith.truncf %87 : vector<4x32xf32> to vector<4x32xbf16>
    %c0_26 = arith.constant 0 : index
    %c0_27 = arith.constant 0 : index
    %c0_28 = arith.constant 0 : index
    %c0_29 = arith.constant 0 : index
    %89 = vector.load %arg7[%c0_26, %c0_27, %c0_28, %c0_29] : memref<1x1x4x32xbf16, #tpu.memory_space<vmem>>, vector<1x1x4x32xbf16>
    %90 = vector.shape_cast %89 : vector<1x1x4x32xbf16> to vector<4x32xbf16>
    %91 = vector.shape_cast %88 : vector<4x32xbf16> to vector<1x1x4x32xbf16>
    tpu.vector_store %arg7[%c0_26, %c0_27, %c0_28, %c0_29], %91 {strides = array<i32>} : memref<1x1x4x32xbf16, #tpu.memory_space<vmem>>, vector<1x1x4x32xbf16>,
    return
  }
  func.func @transform_0(%arg0: i32, %arg1: i32) -> (i32, i32, i32, i32) {
    %c0_i32 = arith.constant 0 : i32
    %c0_i32_0 = arith.constant 0 : i32
    %c0_i32_1 = arith.constant 0 : i32
    %c0_i32_2 = arith.constant 0 : i32
    return %arg0, %c0_i32, %c0_i32_0, %c0_i32_1 : i32, i32, i32, i32
  }
  func.func @transform_1(%arg0: i32, %arg1: i32) -> (i32, i32) {
    %c0_i32 = arith.constant 0 : i32
    %c0_i32_0 = arith.constant 0 : i32
    %c0_i32_1 = arith.constant 0 : i32
    return %c0_i32, %c0_i32_0 : i32, i32
  }
  func.func @transform_2(%arg0: i32, %arg1: i32) -> (i32, i32) {
    %c0_i32 = arith.constant 0 : i32
    %c0_i32_0 = arith.constant 0 : i32
    %c0_i32_1 = arith.constant 0 : i32
    return %c0_i32, %c0_i32_0 : i32, i32
  }
  func.func @transform_3(%arg0: i32, %arg1: i32) -> (i32, i32) {
    %c0_i32 = arith.constant 0 : i32
    %c0_i32_0 = arith.constant 0 : i32
    %c0_i32_1 = arith.constant 0 : i32
    return %c0_i32, %c0_i32_0 : i32, i32
  }
  func.func @transform_4(%arg0: i32, %arg1: i32) -> (i32, i32) {
    %c0_i32 = arith.constant 0 : i32
    %c0_i32_0 = arith.constant 0 : i32
    %c0_i32_1 = arith.constant 0 : i32
    return %c0_i32, %c0_i32_0 : i32, i32
  }
  func.func @transform_5(%arg0: i32, %arg1: i32) -> (i32, i32, i32, i32) {
    %c0_i32 = arith.constant 0 : i32
    %c0_i32_0 = arith.constant 0 : i32
    %c0_i32_1 = arith.constant 0 : i32
    return %arg0, %arg1, %c0_i32, %c0_i32_0 : i32, i32, i32, i32
  }
}

module attributes {stable_mosaic.version = 11 : i64} {
  func.func @_dwpw_block_kernel(%arg0: i32, %arg1: i32, %arg2: memref<1x6x6x32xbf16, #tpu.memory_space<vmem>>, %arg3: memref<9x32xbf16, #tpu.memory_space<vmem>>, %arg4: memref<1x32xf32, #tpu.memory_space<vmem>>, %arg5: memref<32x32xbf16, #tpu.memory_space<vmem>>, %arg6: memref<1x32xf32, #tpu.memory_space<vmem>>, %arg7: memref<1x1x4x32xbf16, #tpu.memory_space<vmem>>) attributes {dimension_semantics = [#tpu.dimension_semantics<parallel>, #tpu.dimension_semantics<parallel>], iteration_bounds = array<i64: 2, 4>, scalar_prefetch = 0 : i64, scratch_operands = 0 : i64, tpu.core_type = #tpu.core_type<tc>, window_params = [{transform_indices = @transform_0, window_bounds = array<i64: 1, 6, 6, 32>}, {pipeline_mode = #tpu.pipeline_mode<synchronous>, transform_indices = @transform_1, window_bounds = array<i64: 9, 32>}, {pipeline_mode = #tpu.pipeline_mode<synchronous>, transform_indices = @transform_2, window_bounds = array<i64: 1, 32>}, {pipeline_mode = #tpu.pipeline_mode<synchronous>, transform_indices = @transform_3, window_bounds = array<i64: 32, 32>}, {pipeline_mode = #tpu.pipeline_mode<synchronous>, transform_indices = @transform_4, window_bounds = array<i64: 1, 32>}, {transform_indices = @transform_5, window_bounds = array<i64: 1, 1, 4, 32>}]} {
    %c0 = arith.constant 0 : index
    %c0_0 = arith.constant 0 : index
    %0 = vector.load %arg3[%c0, %c0_0] : memref<9x32xbf16, #tpu.memory_space<vmem>>, vector<9x32xbf16>
    %1 = arith.extf %0 : vector<9x32xbf16> to vector<9x32xf32>
    %cst = arith.constant 0.000000e+00 : f32
    %2 = vector.broadcast %cst : f32 to vector<4x32xf32>
    %c0_i32 = arith.constant 0 : i32
    %3 = arith.addi %arg1, %c0_i32 : i32
    %c0_1 = arith.constant 0 : index
    %4 = arith.index_cast %3 : i32 to index
    %c0_2 = arith.constant 0 : index
    %c0_3 = arith.constant 0 : index
    %5 = vector.load %arg2[%c0_1, %4, %c0_2, %c0_3] : memref<1x6x6x32xbf16, #tpu.memory_space<vmem>>, vector<1x1x6x32xbf16>
    %6 = vector.shape_cast %5 : vector<1x1x6x32xbf16> to vector<6x32xbf16>
    %7 = arith.extf %6 : vector<6x32xbf16> to vector<6x32xf32>
    %8 = vector.extract_strided_slice %7 {offsets = [0, 0], sizes = [4, 32], strides = [1, 1]} : vector<6x32xf32> to vector<4x32xf32>
    %9 = vector.extract_strided_slice %1 {offsets = [0, 0], sizes = [1, 32], strides = [1, 1]} : vector<9x32xf32> to vector<1x32xf32>
    %10 = vector.broadcast %9 : vector<1x32xf32> to vector<4x32xf32>
    %11 = arith.mulf %8, %10 : vector<4x32xf32>
    %12 = arith.addf %2, %11 : vector<4x32xf32>
    %13 = vector.extract_strided_slice %7 {offsets = [1, 0], sizes = [4, 32], strides = [1, 1]} : vector<6x32xf32> to vector<4x32xf32>
    %14 = vector.extract_strided_slice %1 {offsets = [1, 0], sizes = [1, 32], strides = [1, 1]} : vector<9x32xf32> to vector<1x32xf32>
    %15 = vector.broadcast %14 : vector<1x32xf32> to vector<4x32xf32>
    %16 = arith.mulf %13, %15 : vector<4x32xf32>
    %17 = arith.addf %12, %16 : vector<4x32xf32>
    %18 = vector.extract_strided_slice %7 {offsets = [2, 0], sizes = [4, 32], strides = [1, 1]} : vector<6x32xf32> to vector<4x32xf32>
    %19 = vector.extract_strided_slice %1 {offsets = [2, 0], sizes = [1, 32], strides = [1, 1]} : vector<9x32xf32> to vector<1x32xf32>
    %20 = vector.broadcast %19 : vector<1x32xf32> to vector<4x32xf32>
    %21 = arith.mulf %18, %20 : vector<4x32xf32>
    %22 = arith.addf %17, %21 : vector<4x32xf32>
    %c1_i32 = arith.constant 1 : i32
    %23 = arith.addi %arg1, %c1_i32 : i32
    %c0_4 = arith.constant 0 : index
    %24 = arith.index_cast %23 : i32 to index
    %c0_5 = arith.constant 0 : index
    %c0_6 = arith.constant 0 : index
    %25 = vector.load %arg2[%c0_4, %24, %c0_5, %c0_6] : memref<1x6x6x32xbf16, #tpu.memory_space<vmem>>, vector<1x1x6x32xbf16>
    %26 = vector.shape_cast %25 : vector<1x1x6x32xbf16> to vector<6x32xbf16>
    %27 = arith.extf %26 : vector<6x32xbf16> to vector<6x32xf32>
    %28 = vector.extract_strided_slice %27 {offsets = [0, 0], sizes = [4, 32], strides = [1, 1]} : vector<6x32xf32> to vector<4x32xf32>
    %29 = vector.extract_strided_slice %1 {offsets = [3, 0], sizes = [1, 32], strides = [1, 1]} : vector<9x32xf32> to vector<1x32xf32>
    %30 = vector.broadcast %29 : vector<1x32xf32> to vector<4x32xf32>
    %31 = arith.mulf %28, %30 : vector<4x32xf32>
    %32 = arith.addf %22, %31 : vector<4x32xf32>
    %33 = vector.extract_strided_slice %27 {offsets = [1, 0], sizes = [4, 32], strides = [1, 1]} : vector<6x32xf32> to vector<4x32xf32>
    %34 = vector.extract_strided_slice %1 {offsets = [4, 0], sizes = [1, 32], strides = [1, 1]} : vector<9x32xf32> to vector<1x32xf32>
    %35 = vector.broadcast %34 : vector<1x32xf32> to vector<4x32xf32>
    %36 = arith.mulf %33, %35 : vector<4x32xf32>
    %37 = arith.addf %32, %36 : vector<4x32xf32>
    %38 = vector.extract_strided_slice %27 {offsets = [2, 0], sizes = [4, 32], strides = [1, 1]} : vector<6x32xf32> to vector<4x32xf32>
    %39 = vector.extract_strided_slice %1 {offsets = [5, 0], sizes = [1, 32], strides = [1, 1]} : vector<9x32xf32> to vector<1x32xf32>
    %40 = vector.broadcast %39 : vector<1x32xf32> to vector<4x32xf32>
    %41 = arith.mulf %38, %40 : vector<4x32xf32>
    %42 = arith.addf %37, %41 : vector<4x32xf32>
    %c2_i32 = arith.constant 2 : i32
    %43 = arith.addi %arg1, %c2_i32 : i32
    %c0_7 = arith.constant 0 : index
    %44 = arith.index_cast %43 : i32 to index
    %c0_8 = arith.constant 0 : index
    %c0_9 = arith.constant 0 : index
    %45 = vector.load %arg2[%c0_7, %44, %c0_8, %c0_9] : memref<1x6x6x32xbf16, #tpu.memory_space<vmem>>, vector<1x1x6x32xbf16>
    %46 = vector.shape_cast %45 : vector<1x1x6x32xbf16> to vector<6x32xbf16>
    %47 = arith.extf %46 : vector<6x32xbf16> to vector<6x32xf32>
    %48 = vector.extract_strided_slice %47 {offsets = [0, 0], sizes = [4, 32], strides = [1, 1]} : vector<6x32xf32> to vector<4x32xf32>
    %49 = vector.extract_strided_slice %1 {offsets = [6, 0], sizes = [1, 32], strides = [1, 1]} : vector<9x32xf32> to vector<1x32xf32>
    %50 = vector.broadcast %49 : vector<1x32xf32> to vector<4x32xf32>
    %51 = arith.mulf %48, %50 : vector<4x32xf32>
    %52 = arith.addf %42, %51 : vector<4x32xf32>
    %53 = vector.extract_strided_slice %47 {offsets = [1, 0], sizes = [4, 32], strides = [1, 1]} : vector<6x32xf32> to vector<4x32xf32>
    %54 = vector.extract_strided_slice %1 {offsets = [7, 0], sizes = [1, 32], strides = [1, 1]} : vector<9x32xf32> to vector<1x32xf32>
    %55 = vector.broadcast %54 : vector<1x32xf32> to vector<4x32xf32>
    %56 = arith.mulf %53, %55 : vector<4x32xf32>
    %57 = arith.addf %52, %56 : vector<4x32xf32>
    %58 = vector.extract_strided_slice %47 {offsets = [2, 0], sizes = [4, 32], strides = [1, 1]} : vector<6x32xf32> to vector<4x32xf32>
    %59 = vector.extract_strided_slice %1 {offsets = [8, 0], sizes = [1, 32], strides = [1, 1]} : vector<9x32xf32> to vector<1x32xf32>
    %60 = vector.broadcast %59 : vector<1x32xf32> to vector<4x32xf32>
    %61 = arith.mulf %58, %60 : vector<4x32xf32>
    %62 = arith.addf %57, %61 : vector<4x32xf32>
    %c0_10 = arith.constant 0 : index
    %c0_11 = arith.constant 0 : index
    %63 = vector.load %arg4[%c0_10, %c0_11] : memref<1x32xf32, #tpu.memory_space<vmem>>, vector<1x32xf32>
    %64 = vector.broadcast %63 : vector<1x32xf32> to vector<4x32xf32>
    %65 = arith.addf %62, %64 : vector<4x32xf32>
    %cst_12 = arith.constant 0.000000e+00 : f32
    %66 = vector.broadcast %cst_12 : f32 to vector<4x32xf32>
    %67 = arith.maximumf %65, %66 : vector<4x32xf32>
    %68 = arith.truncf %67 : vector<4x32xf32> to vector<4x32xbf16>
    %c0_13 = arith.constant 0 : index
    %c0_14 = arith.constant 0 : index
    %69 = vector.load %arg5[%c0_13, %c0_14] : memref<32x32xbf16, #tpu.memory_space<vmem>>, vector<32x32xbf16>
    %cst_15 = arith.constant dense<0.000000e+00> : vector<4x32xf32>
    %70 = tpu.matmul %68, %69, %cst_15 {dimension_numbers = #tpu.dot_dimension_numbers<[1], [0], [0], [1], [0, 0, 1, 1], [], []>} : vector<4x32xbf16>, vector<32x32xbf16>, vector<4x32xf32> -> vector<4x32xf32>
    %c0_16 = arith.constant 0 : index
    %c0_17 = arith.constant 0 : index
    %71 = vector.load %arg6[%c0_16, %c0_17] : memref<1x32xf32, #tpu.memory_space<vmem>>, vector<1x32xf32>
    %72 = vector.broadcast %71 : vector<1x32xf32> to vector<4x32xf32>
    %73 = arith.addf %70, %72 : vector<4x32xf32>
    %cst_18 = arith.constant 0.000000e+00 : f32
    %74 = vector.broadcast %cst_18 : f32 to vector<4x32xf32>
    %75 = arith.maximumf %73, %74 : vector<4x32xf32>
    %76 = arith.truncf %75 : vector<4x32xf32> to vector<4x32xbf16>
    %c0_19 = arith.constant 0 : index
    %c0_20 = arith.constant 0 : index
    %c0_21 = arith.constant 0 : index
    %c0_22 = arith.constant 0 : index
    %77 = vector.load %arg7[%c0_19, %c0_20, %c0_21, %c0_22] : memref<1x1x4x32xbf16, #tpu.memory_space<vmem>>, vector<1x1x4x32xbf16>
    %78 = vector.shape_cast %77 : vector<1x1x4x32xbf16> to vector<4x32xbf16>
    %79 = vector.shape_cast %76 : vector<4x32xbf16> to vector<1x1x4x32xbf16>
    tpu.vector_store %arg7[%c0_19, %c0_20, %c0_21, %c0_22], %79 {strides = array<i32>} : memref<1x1x4x32xbf16, #tpu.memory_space<vmem>>, vector<1x1x4x32xbf16>,
    return
  }
  func.func @transform_0(%arg0: i32, %arg1: i32) -> (i32, i32, i32, i32) {
    %c0_i32 = arith.constant 0 : i32
    %c0_i32_0 = arith.constant 0 : i32
    %c0_i32_1 = arith.constant 0 : i32
    %c0_i32_2 = arith.constant 0 : i32
    return %arg0, %c0_i32, %c0_i32_0, %c0_i32_1 : i32, i32, i32, i32
  }
  func.func @transform_1(%arg0: i32, %arg1: i32) -> (i32, i32) {
    %c0_i32 = arith.constant 0 : i32
    %c0_i32_0 = arith.constant 0 : i32
    %c0_i32_1 = arith.constant 0 : i32
    return %c0_i32, %c0_i32_0 : i32, i32
  }
  func.func @transform_2(%arg0: i32, %arg1: i32) -> (i32, i32) {
    %c0_i32 = arith.constant 0 : i32
    %c0_i32_0 = arith.constant 0 : i32
    %c0_i32_1 = arith.constant 0 : i32
    return %c0_i32, %c0_i32_0 : i32, i32
  }
  func.func @transform_3(%arg0: i32, %arg1: i32) -> (i32, i32) {
    %c0_i32 = arith.constant 0 : i32
    %c0_i32_0 = arith.constant 0 : i32
    %c0_i32_1 = arith.constant 0 : i32
    return %c0_i32, %c0_i32_0 : i32, i32
  }
  func.func @transform_4(%arg0: i32, %arg1: i32) -> (i32, i32) {
    %c0_i32 = arith.constant 0 : i32
    %c0_i32_0 = arith.constant 0 : i32
    %c0_i32_1 = arith.constant 0 : i32
    return %c0_i32, %c0_i32_0 : i32, i32
  }
  func.func @transform_5(%arg0: i32, %arg1: i32) -> (i32, i32, i32, i32) {
    %c0_i32 = arith.constant 0 : i32
    %c0_i32_0 = arith.constant 0 : i32
    %c0_i32_1 = arith.constant 0 : i32
    return %arg0, %arg1, %c0_i32, %c0_i32_0 : i32, i32, i32, i32
  }
}

module attributes {stable_mosaic.version = 11 : i64} {
  func.func @_dwpw_block_kernel(%arg0: i32, %arg1: i32, %arg2: memref<4x6x6x32xbf16, #tpu.memory_space<vmem>>, %arg3: memref<9x32xbf16, #tpu.memory_space<vmem>>, %arg4: memref<1x32xf32, #tpu.memory_space<vmem>>, %arg5: memref<32x64xbf16, #tpu.memory_space<vmem>>, %arg6: memref<1x64xf32, #tpu.memory_space<vmem>>, %arg7: memref<1x1x5x64xbf16, #tpu.memory_space<vmem>>) attributes {dimension_semantics = [#tpu.dimension_semantics<parallel>, #tpu.dimension_semantics<parallel>], iteration_bounds = array<i64: 2, 5>, scalar_prefetch = 0 : i64, scratch_operands = 0 : i64, tpu.core_type = #tpu.core_type<tc>, window_params = [{transform_indices = @transform_0, window_bounds = array<i64: 4, 6, 6, 32>}, {pipeline_mode = #tpu.pipeline_mode<synchronous>, transform_indices = @transform_1, window_bounds = array<i64: 9, 32>}, {pipeline_mode = #tpu.pipeline_mode<synchronous>, transform_indices = @transform_2, window_bounds = array<i64: 1, 32>}, {pipeline_mode = #tpu.pipeline_mode<synchronous>, transform_indices = @transform_3, window_bounds = array<i64: 32, 64>}, {pipeline_mode = #tpu.pipeline_mode<synchronous>, transform_indices = @transform_4, window_bounds = array<i64: 1, 64>}, {transform_indices = @transform_5, window_bounds = array<i64: 1, 1, 5, 64>}]} {
    %c0 = arith.constant 0 : index
    %c0_0 = arith.constant 0 : index
    %0 = vector.load %arg3[%c0, %c0_0] : memref<9x32xbf16, #tpu.memory_space<vmem>>, vector<9x32xbf16>
    %1 = arith.extf %0 : vector<9x32xbf16> to vector<9x32xf32>
    %cst = arith.constant 0.000000e+00 : f32
    %2 = vector.broadcast %cst : f32 to vector<5x32xf32>
    %c0_i32 = arith.constant 0 : i32
    %3 = arith.addi %arg1, %c0_i32 : i32
    %c0_1 = arith.constant 0 : index
    %4 = arith.index_cast %3 : i32 to index
    %c0_2 = arith.constant 0 : index
    %c0_3 = arith.constant 0 : index
    %5 = vector.load %arg2[%c0_1, %4, %c0_2, %c0_3] : memref<4x6x6x32xbf16, #tpu.memory_space<vmem>>, vector<1x1x6x32xbf16>
    %6 = vector.shape_cast %5 : vector<1x1x6x32xbf16> to vector<6x32xbf16>
    %7 = arith.extf %6 : vector<6x32xbf16> to vector<6x32xf32>
    %c1 = arith.constant 1 : index
    %8 = arith.index_cast %3 : i32 to index
    %c0_4 = arith.constant 0 : index
    %c0_5 = arith.constant 0 : index
    %9 = vector.load %arg2[%c1, %8, %c0_4, %c0_5] : memref<4x6x6x32xbf16, #tpu.memory_space<vmem>>, vector<1x1x6x32xbf16>
    %10 = vector.shape_cast %9 : vector<1x1x6x32xbf16> to vector<6x32xbf16>
    %11 = arith.extf %10 : vector<6x32xbf16> to vector<6x32xf32>
    %12 = vector.extract_strided_slice %7 {offsets = [0, 0], sizes = [5, 32], strides = [1, 1]} : vector<6x32xf32> to vector<5x32xf32>
    %13 = vector.extract_strided_slice %1 {offsets = [0, 0], sizes = [1, 32], strides = [1, 1]} : vector<9x32xf32> to vector<1x32xf32>
    %14 = vector.broadcast %13 : vector<1x32xf32> to vector<5x32xf32>
    %15 = arith.mulf %12, %14 : vector<5x32xf32>
    %16 = arith.addf %2, %15 : vector<5x32xf32>
    %17 = vector.extract_strided_slice %11 {offsets = [0, 0], sizes = [5, 32], strides = [1, 1]} : vector<6x32xf32> to vector<5x32xf32>
    %18 = vector.extract_strided_slice %1 {offsets = [1, 0], sizes = [1, 32], strides = [1, 1]} : vector<9x32xf32> to vector<1x32xf32>
    %19 = vector.broadcast %18 : vector<1x32xf32> to vector<5x32xf32>
    %20 = arith.mulf %17, %19 : vector<5x32xf32>
    %21 = arith.addf %16, %20 : vector<5x32xf32>
    %22 = vector.extract_strided_slice %7 {offsets = [1, 0], sizes = [5, 32], strides = [1, 1]} : vector<6x32xf32> to vector<5x32xf32>
    %23 = vector.extract_strided_slice %1 {offsets = [2, 0], sizes = [1, 32], strides = [1, 1]} : vector<9x32xf32> to vector<1x32xf32>
    %24 = vector.broadcast %23 : vector<1x32xf32> to vector<5x32xf32>
    %25 = arith.mulf %22, %24 : vector<5x32xf32>
    %26 = arith.addf %21, %25 : vector<5x32xf32>
    %c0_i32_6 = arith.constant 0 : i32
    %27 = arith.addi %arg1, %c0_i32_6 : i32
    %c2 = arith.constant 2 : index
    %28 = arith.index_cast %27 : i32 to index
    %c0_7 = arith.constant 0 : index
    %c0_8 = arith.constant 0 : index
    %29 = vector.load %arg2[%c2, %28, %c0_7, %c0_8] : memref<4x6x6x32xbf16, #tpu.memory_space<vmem>>, vector<1x1x6x32xbf16>
    %30 = vector.shape_cast %29 : vector<1x1x6x32xbf16> to vector<6x32xbf16>
    %31 = arith.extf %30 : vector<6x32xbf16> to vector<6x32xf32>
    %c3 = arith.constant 3 : index
    %32 = arith.index_cast %27 : i32 to index
    %c0_9 = arith.constant 0 : index
    %c0_10 = arith.constant 0 : index
    %33 = vector.load %arg2[%c3, %32, %c0_9, %c0_10] : memref<4x6x6x32xbf16, #tpu.memory_space<vmem>>, vector<1x1x6x32xbf16>
    %34 = vector.shape_cast %33 : vector<1x1x6x32xbf16> to vector<6x32xbf16>
    %35 = arith.extf %34 : vector<6x32xbf16> to vector<6x32xf32>
    %36 = vector.extract_strided_slice %31 {offsets = [0, 0], sizes = [5, 32], strides = [1, 1]} : vector<6x32xf32> to vector<5x32xf32>
    %37 = vector.extract_strided_slice %1 {offsets = [3, 0], sizes = [1, 32], strides = [1, 1]} : vector<9x32xf32> to vector<1x32xf32>
    %38 = vector.broadcast %37 : vector<1x32xf32> to vector<5x32xf32>
    %39 = arith.mulf %36, %38 : vector<5x32xf32>
    %40 = arith.addf %26, %39 : vector<5x32xf32>
    %41 = vector.extract_strided_slice %35 {offsets = [0, 0], sizes = [5, 32], strides = [1, 1]} : vector<6x32xf32> to vector<5x32xf32>
    %42 = vector.extract_strided_slice %1 {offsets = [4, 0], sizes = [1, 32], strides = [1, 1]} : vector<9x32xf32> to vector<1x32xf32>
    %43 = vector.broadcast %42 : vector<1x32xf32> to vector<5x32xf32>
    %44 = arith.mulf %41, %43 : vector<5x32xf32>
    %45 = arith.addf %40, %44 : vector<5x32xf32>
    %46 = vector.extract_strided_slice %31 {offsets = [1, 0], sizes = [5, 32], strides = [1, 1]} : vector<6x32xf32> to vector<5x32xf32>
    %47 = vector.extract_strided_slice %1 {offsets = [5, 0], sizes = [1, 32], strides = [1, 1]} : vector<9x32xf32> to vector<1x32xf32>
    %48 = vector.broadcast %47 : vector<1x32xf32> to vector<5x32xf32>
    %49 = arith.mulf %46, %48 : vector<5x32xf32>
    %50 = arith.addf %45, %49 : vector<5x32xf32>
    %c1_i32 = arith.constant 1 : i32
    %51 = arith.addi %arg1, %c1_i32 : i32
    %c0_11 = arith.constant 0 : index
    %52 = arith.index_cast %51 : i32 to index
    %c0_12 = arith.constant 0 : index
    %c0_13 = arith.constant 0 : index
    %53 = vector.load %arg2[%c0_11, %52, %c0_12, %c0_13] : memref<4x6x6x32xbf16, #tpu.memory_space<vmem>>, vector<1x1x6x32xbf16>
    %54 = vector.shape_cast %53 : vector<1x1x6x32xbf16> to vector<6x32xbf16>
    %55 = arith.extf %54 : vector<6x32xbf16> to vector<6x32xf32>
    %c1_14 = arith.constant 1 : index
    %56 = arith.index_cast %51 : i32 to index
    %c0_15 = arith.constant 0 : index
    %c0_16 = arith.constant 0 : index
    %57 = vector.load %arg2[%c1_14, %56, %c0_15, %c0_16] : memref<4x6x6x32xbf16, #tpu.memory_space<vmem>>, vector<1x1x6x32xbf16>
    %58 = vector.shape_cast %57 : vector<1x1x6x32xbf16> to vector<6x32xbf16>
    %59 = arith.extf %58 : vector<6x32xbf16> to vector<6x32xf32>
    %60 = vector.extract_strided_slice %55 {offsets = [0, 0], sizes = [5, 32], strides = [1, 1]} : vector<6x32xf32> to vector<5x32xf32>
    %61 = vector.extract_strided_slice %1 {offsets = [6, 0], sizes = [1, 32], strides = [1, 1]} : vector<9x32xf32> to vector<1x32xf32>
    %62 = vector.broadcast %61 : vector<1x32xf32> to vector<5x32xf32>
    %63 = arith.mulf %60, %62 : vector<5x32xf32>
    %64 = arith.addf %50, %63 : vector<5x32xf32>
    %65 = vector.extract_strided_slice %59 {offsets = [0, 0], sizes = [5, 32], strides = [1, 1]} : vector<6x32xf32> to vector<5x32xf32>
    %66 = vector.extract_strided_slice %1 {offsets = [7, 0], sizes = [1, 32], strides = [1, 1]} : vector<9x32xf32> to vector<1x32xf32>
    %67 = vector.broadcast %66 : vector<1x32xf32> to vector<5x32xf32>
    %68 = arith.mulf %65, %67 : vector<5x32xf32>
    %69 = arith.addf %64, %68 : vector<5x32xf32>
    %70 = vector.extract_strided_slice %55 {offsets = [1, 0], sizes = [5, 32], strides = [1, 1]} : vector<6x32xf32> to vector<5x32xf32>
    %71 = vector.extract_strided_slice %1 {offsets = [8, 0], sizes = [1, 32], strides = [1, 1]} : vector<9x32xf32> to vector<1x32xf32>
    %72 = vector.broadcast %71 : vector<1x32xf32> to vector<5x32xf32>
    %73 = arith.mulf %70, %72 : vector<5x32xf32>
    %74 = arith.addf %69, %73 : vector<5x32xf32>
    %c0_17 = arith.constant 0 : index
    %c0_18 = arith.constant 0 : index
    %75 = vector.load %arg4[%c0_17, %c0_18] : memref<1x32xf32, #tpu.memory_space<vmem>>, vector<1x32xf32>
    %76 = vector.broadcast %75 : vector<1x32xf32> to vector<5x32xf32>
    %77 = arith.addf %74, %76 : vector<5x32xf32>
    %cst_19 = arith.constant 0.000000e+00 : f32
    %78 = vector.broadcast %cst_19 : f32 to vector<5x32xf32>
    %79 = arith.maximumf %77, %78 : vector<5x32xf32>
    %80 = arith.truncf %79 : vector<5x32xf32> to vector<5x32xbf16>
    %c0_20 = arith.constant 0 : index
    %c0_21 = arith.constant 0 : index
    %81 = vector.load %arg5[%c0_20, %c0_21] : memref<32x64xbf16, #tpu.memory_space<vmem>>, vector<32x64xbf16>
    %cst_22 = arith.constant dense<0.000000e+00> : vector<5x64xf32>
    %82 = tpu.matmul %80, %81, %cst_22 {dimension_numbers = #tpu.dot_dimension_numbers<[1], [0], [0], [1], [0, 0, 1, 1], [], []>} : vector<5x32xbf16>, vector<32x64xbf16>, vector<5x64xf32> -> vector<5x64xf32>
    %c0_23 = arith.constant 0 : index
    %c0_24 = arith.constant 0 : index
    %83 = vector.load %arg6[%c0_23, %c0_24] : memref<1x64xf32, #tpu.memory_space<vmem>>, vector<1x64xf32>
    %84 = vector.broadcast %83 : vector<1x64xf32> to vector<5x64xf32>
    %85 = arith.addf %82, %84 : vector<5x64xf32>
    %cst_25 = arith.constant 0.000000e+00 : f32
    %86 = vector.broadcast %cst_25 : f32 to vector<5x64xf32>
    %87 = arith.maximumf %85, %86 : vector<5x64xf32>
    %88 = arith.truncf %87 : vector<5x64xf32> to vector<5x64xbf16>
    %c0_26 = arith.constant 0 : index
    %c0_27 = arith.constant 0 : index
    %c0_28 = arith.constant 0 : index
    %c0_29 = arith.constant 0 : index
    %89 = vector.load %arg7[%c0_26, %c0_27, %c0_28, %c0_29] : memref<1x1x5x64xbf16, #tpu.memory_space<vmem>>, vector<1x1x5x64xbf16>
    %90 = vector.shape_cast %89 : vector<1x1x5x64xbf16> to vector<5x64xbf16>
    %91 = vector.shape_cast %88 : vector<5x64xbf16> to vector<1x1x5x64xbf16>
    tpu.vector_store %arg7[%c0_26, %c0_27, %c0_28, %c0_29], %91 {strides = array<i32>} : memref<1x1x5x64xbf16, #tpu.memory_space<vmem>>, vector<1x1x5x64xbf16>,
    return
  }
  func.func @transform_0(%arg0: i32, %arg1: i32) -> (i32, i32, i32, i32) {
    %c0_i32 = arith.constant 0 : i32
    %c0_i32_0 = arith.constant 0 : i32
    %c0_i32_1 = arith.constant 0 : i32
    %c0_i32_2 = arith.constant 0 : i32
    return %arg0, %c0_i32, %c0_i32_0, %c0_i32_1 : i32, i32, i32, i32
  }
  func.func @transform_1(%arg0: i32, %arg1: i32) -> (i32, i32) {
    %c0_i32 = arith.constant 0 : i32
    %c0_i32_0 = arith.constant 0 : i32
    %c0_i32_1 = arith.constant 0 : i32
    return %c0_i32, %c0_i32_0 : i32, i32
  }
  func.func @transform_2(%arg0: i32, %arg1: i32) -> (i32, i32) {
    %c0_i32 = arith.constant 0 : i32
    %c0_i32_0 = arith.constant 0 : i32
    %c0_i32_1 = arith.constant 0 : i32
    return %c0_i32, %c0_i32_0 : i32, i32
  }
  func.func @transform_3(%arg0: i32, %arg1: i32) -> (i32, i32) {
    %c0_i32 = arith.constant 0 : i32
    %c0_i32_0 = arith.constant 0 : i32
    %c0_i32_1 = arith.constant 0 : i32
    return %c0_i32, %c0_i32_0 : i32, i32
  }
  func.func @transform_4(%arg0: i32, %arg1: i32) -> (i32, i32) {
    %c0_i32 = arith.constant 0 : i32
    %c0_i32_0 = arith.constant 0 : i32
    %c0_i32_1 = arith.constant 0 : i32
    return %c0_i32, %c0_i32_0 : i32, i32
  }
  func.func @transform_5(%arg0: i32, %arg1: i32) -> (i32, i32, i32, i32) {
    %c0_i32 = arith.constant 0 : i32
    %c0_i32_0 = arith.constant 0 : i32
    %c0_i32_1 = arith.constant 0 : i32
    return %arg0, %arg1, %c0_i32, %c0_i32_0 : i32, i32, i32, i32
  }
}

</mosaic_0001>

<llo_original>
// kernel: _lambda_.6
$region0: #{_lambda_.6}
  #allocation0 [shape = 'u32[]', space=smem, size = 0x4, offset = 0x4, fixed_abs, tag = 'smem constant byte address 0x4 - core index']
  #allocation1 [shape = 'u32[144,128]{1,0:T(1,128)}', space=vmem, size = 0x12000, scoped, tag = 'internal scratch']
  %s0 = inlined_call_operand.vmem [shape: bf16[2,10,10,8], index: 0, kind: input, shape index: {}]
  %s1 = inlined_call_operand.vmem [shape: bf16[9,8], index: 1, kind: input, shape index: {}]
  %s2 = inlined_call_operand.vmem [shape: f32[1,8], index: 2, kind: input, shape index: {}]
  %s3 = inlined_call_operand.vmem [shape: bf16[8,16], index: 3, kind: input, shape index: {}]
  %s4 = inlined_call_operand.vmem [shape: f32[1,16], index: 4, kind: input, shape index: {}]
  %s5 = inlined_call_operand.vmem [shape: bf16[2,8,8,16], index: 5, kind: output, shape index: {}]
  %s6 = sld [smem:[#allocation0]]
  $region53: #{_lambda_.6} parent=0
    _
  %s8 = ssub.s32 1, %s6
  %s9 = scalar_select 0, %s8, %s6
  loop: start=0, step=1, limit=18
  $region2: #{_lambda_.6} parent=0 // loop_pre_header
    _
  $region3: #{_lambda_.6} parent=0 // loop_header
    %s11 = sphi 0, %s15
    %p12 = scmp.ge.s32.totalorder %s11, 18
    %s18 = sphi 0, %s30
    %s19 = sphi 0, %s26
    %s20 = sphi 0, %s18
    %s21 = sphi 0, %s19
    %s22 = sphi 0, %s20
    %s23 = sphi 0, %s21
    %s33 = sphi 0, %s35
    %s36 = sphi 0, %s33
    %s37 = sphi 0, %s36
    %s53 = sphi 0, %s37
    %s57 = sphi 0, %s57
    %s59 = sphi 0, %s57
    %s60 = sphi 0, %s59
    %s74 = sphi 0, %s60
    %s78 = sphi 0, %s78
    %s80 = sphi 0, %s78
    %s81 = sphi 0, %s80
    %s95 = sphi 0, %s81
    %s99 = sphi 0, %s99
    %s101 = sphi 0, %s99
    %s102 = sphi 0, %s101
    %s116 = sphi 0, %s102
    %s120 = sphi 0, %s120
    %s122 = sphi 0, %s120
    %s123 = sphi 0, %s122
    %s137 = sphi 0, %s123
    %s145 = sphi 0, %s147
    %s148 = sphi 0, %s145
    %s149 = sphi 0, %s148
    %s165 = sphi 0, %s149
  $region4: #{_lambda_.6} parent=0 // loop_header_branch
    %14 = sbr.rel (%p12) target = $region8
  $region5: #{_lambda_.6} parent=0 // loop_body
    %s16 = ssub.s32 %s11, 1
    %s17 = ssub.s32 %s11, 2
    %s24 = sadd.s32 1, %s19
    %p25 = scmp.ge.s32.totalorder %s24, 8
    %s26 = scalar_select %p25, 0, %s24
    %s27 = sadd.s32 1, %s18
    %s28 = scalar_select %p25, %s27, %s18
    %p29 = scmp.ge.s32.totalorder %s28, 2
    %s30 = scalar_select %p29, 0, %s28
    %s31 = ssub.s32 %s18, %s30
    %p32 = scmp.eq.s32.totalorder %s31, 0
    %s34 = sadd.s32 %s33, 1
    %s35 = scalar_select %p32, %s33, %s34
    %p38 = pneg %p32
    %p39 = scmp.eq.s32.totalorder %s11, 15
    %p40 = por %p38, %p39
    %p41 = scmp.ne.s32.totalorder %s33, %s36
    %p42 = scmp.eq.s32.totalorder %s11, 0
    %p43 = por %p41, %p42
    %p44 = scmp.ne.s32.totalorder %s33, %s36
    %p45 = scmp.eq.s32.totalorder %s16, 15
    %p46 = por %p44, %p45
    %p47 = scmp.ne.s32.totalorder %s36, %s37
    %p48 = scmp.eq.s32.totalorder %s16, 0
    %p49 = por %p47, %p48
    %p50 = scmp.ne.s32.totalorder %s36, %s37
    %p51 = scmp.eq.s32.totalorder %s17, 15
    %p52 = por %p50, %p51
    %p54 = scmp.ne.s32.totalorder %s37, %s53
    %p55 = scmp.eq.s32.totalorder %s17, 0
    %p56 = por %p54, %p55
    %s58 = sadd.s32 %s57, 1
    %p61 = scmp.eq.s32.totalorder %s11, 15
    %p62 = scmp.ne.s32.totalorder %s57, %s59
    %p63 = scmp.eq.s32.totalorder %s11, 0
    %p64 = por %p62, %p63
    %p65 = scmp.ne.s32.totalorder %s57, %s59
    %p66 = scmp.eq.s32.totalorder %s16, 15
    %p67 = por %p65, %p66
    %p68 = scmp.ne.s32.totalorder %s59, %s60
    %p69 = scmp.eq.s32.totalorder %s16, 0
    %p70 = por %p68, %p69
    %p71 = scmp.ne.s32.totalorder %s59, %s60
    %p72 = scmp.eq.s32.totalorder %s17, 15
    %p73 = por %p71, %p72
    %p75 = scmp.ne.s32.totalorder %s60, %s74
    %p76 = scmp.eq.s32.totalorder %s17, 0
    %p77 = por %p75, %p76
    %s79 = sadd.s32 %s78, 1
    %p82 = scmp.eq.s32.totalorder %s11, 15
    %p83 = scmp.ne.s32.totalorder %s78, %s80
    %p84 = scmp.eq.s32.totalorder %s11, 0
    %p85 = por %p83, %p84
    %p86 = scmp.ne.s32.totalorder %s78, %s80
    %p87 = scmp.eq.s32.totalorder %s16, 15
    %p88 = por %p86, %p87
    %p89 = scmp.ne.s32.totalorder %s80, %s81
    %p90 = scmp.eq.s32.totalorder %s16, 0
    %p91 = por %p89, %p90
    %p92 = scmp.ne.s32.totalorder %s80, %s81
    %p93 = scmp.eq.s32.totalorder %s17, 15
    %p94 = por %p92, %p93
    %p96 = scmp.ne.s32.totalorder %s81, %s95
    %p97 = scmp.eq.s32.totalorder %s17, 0
    %p98 = por %p96, %p97
    %s100 = sadd.s32 %s99, 1
    %p103 = scmp.eq.s32.totalorder %s11, 15
    %p104 = scmp.ne.s32.totalorder %s99, %s101
    %p105 = scmp.eq.s32.totalorder %s11, 0
    %p106 = por %p104, %p105
    %p107 = scmp.ne.s32.totalorder %s99, %s101
    %p108 = scmp.eq.s32.totalorder %s16, 15
    %p109 = por %p107, %p108
    %p110 = scmp.ne.s32.totalorder %s101, %s102
    %p111 = scmp.eq.s32.totalorder %s16, 0
    %p112 = por %p110, %p111
    %p113 = scmp.ne.s32.totalorder %s101, %s102
    %p114 = scmp.eq.s32.totalorder %s17, 15
    %p115 = por %p113, %p114
    %p117 = scmp.ne.s32.totalorder %s102, %s116
    %p118 = scmp.eq.s32.totalorder %s17, 0
    %p119 = por %p117, %p118
    %s121 = sadd.s32 %s120, 1
    %p124 = scmp.eq.s32.totalorder %s11, 15
    %p125 = scmp.ne.s32.totalorder %s120, %s122
    %p126 = scmp.eq.s32.totalorder %s11, 0
    %p127 = por %p125, %p126
    %p128 = scmp.ne.s32.totalorder %s120, %s122
    %p129 = scmp.eq.s32.totalorder %s16, 15
    %p130 = por %p128, %p129
    %p131 = scmp.ne.s32.totalorder %s122, %s123
    %p132 = scmp.eq.s32.totalorder %s16, 0
    %p133 = por %p131, %p132
    %p134 = scmp.ne.s32.totalorder %s122, %s123
    %p135 = scmp.eq.s32.totalorder %s17, 15
    %p136 = por %p134, %p135
    %p138 = scmp.ne.s32.totalorder %s123, %s137
    %p139 = scmp.eq.s32.totalorder %s17, 0
    %p140 = por %p138, %p139
    %s141 = ssub.s32 %s18, %s30
    %s142 = ssub.s32 %s19, %s26
    %s143 = sor.u32 %s141, %s142
    %p144 = scmp.eq.s32.totalorder %s143, 0
    %s146 = sadd.s32 %s145, 1
    %s147 = scalar_select %p144, %s145, %s146
    %p150 = pneg %p144
    %p151 = scmp.eq.s32.totalorder %s11, 15
    %p152 = por %p150, %p151
    %p153 = scmp.ne.s32.totalorder %s145, %s148
    %p154 = scmp.eq.s32.totalorder %s11, 0
    %p155 = por %p153, %p154
    %p156 = scmp.ne.s32.totalorder %s145, %s148
    %p157 = scmp.eq.s32.totalorder %s16, 15
    %p158 = por %p156, %p157
    %p159 = scmp.ne.s32.totalorder %s148, %s149
    %p160 = scmp.eq.s32.totalorder %s16, 0
    %p161 = por %p159, %p160
    %p162 = scmp.ne.s32.totalorder %s148, %s149
    %p163 = scmp.eq.s32.totalorder %s17, 15
    %p164 = por %p162, %p163
    %p166 = scmp.ne.s32.totalorder %s149, %s165
    %p167 = scmp.eq.s32.totalorder %s17, 0
    %p168 = por %p166, %p167
    %p169 = scmp.le.s32.totalorder 1, %s11
    %p170 = scmp.lt.s32.totalorder %s11, 17
    %p171 = pnand %p169, %p170
    %p172 = pneg %p171
    // Predicated region
    $region9: #{_lambda_.6} parent=5 // pred_check
      _
    $region10: #{_lambda_.6} parent=5 // pred_check_branch
      %174 = sbr.rel (%p171) target = $region12
    $region11: #{_lambda_.6} parent=5 // pred_region
      %s175 = ssub.s32 %s11, 1
      // Predicated region
      $region13: #{_lambda_.6} parent=11 // pred_check
        %p176 = pneg %p70
      $region14: #{_lambda_.6} parent=11 // pred_check_branch
        %178 = sbr.rel (%p176) target = $region16
      $region15: #{_lambda_.6} parent=11 // pred_region
        _
      $region16: #{_lambda_.6} parent=11 // pred_fallthru
        _
      // Predicated region
      $region17: #{_lambda_.6} parent=11 // pred_check
        %p179 = pneg %p91
      $region18: #{_lambda_.6} parent=11 // pred_check_branch
        %181 = sbr.rel (%p179) target = $region20
      $region19: #{_lambda_.6} parent=11 // pred_region
        _
      $region20: #{_lambda_.6} parent=11 // pred_fallthru
        _
      // Predicated region
      $region21: #{_lambda_.6} parent=11 // pred_check
        %p182 = pneg %p112
      $region22: #{_lambda_.6} parent=11 // pred_check_branch
        %184 = sbr.rel (%p182) target = $region24
      $region23: #{_lambda_.6} parent=11 // pred_region
        _
      $region24: #{_lambda_.6} parent=11 // pred_fallthru
        _
      // Predicated region
      $region25: #{_lambda_.6} parent=11 // pred_check
        %p185 = pneg %p133
      $region26: #{_lambda_.6} parent=11 // pred_check_branch
        %187 = sbr.rel (%p185) target = $region28
      $region27: #{_lambda_.6} parent=11 // pred_region
        _
      $region28: #{_lambda_.6} parent=11 // pred_fallthru
        _
    $region12: #{_lambda_.6} parent=5 // pred_fallthru
      _
    %p188 = scmp.lt.s32.totalorder %s11, 16
    // Predicated region
    $region29: #{_lambda_.6} parent=5 // pred_check
      %p189 = pneg %p188
    $region30: #{_lambda_.6} parent=5 // pred_check_branch
      %191 = sbr.rel (%p189) target = $region32
    $region31: #{_lambda_.6} parent=5 // pred_region
      // Predicated region
      $region33: #{_lambda_.6} parent=31 // pred_check
        %p192 = pneg %p43
      $region34: #{_lambda_.6} parent=31 // pred_check_branch
        %194 = sbr.rel (%p192) target = $region36
      $region35: #{_lambda_.6} parent=31 // pred_region
        %p195 = scmp.lt.s32.totalorder %s18, 1
        %s196 = scalar_select %p195, %s18, 1
        %s197 = smul.addr %s196, 20
        %s198 = smul.addr %s197, 4
        %s199 = scalar_lea.vmem %s0, %s198
      $region36: #{_lambda_.6} parent=31 // pred_fallthru
        _
    $region32: #{_lambda_.6} parent=5 // pred_fallthru
      _
    %p200 = scmp.le.s32.totalorder 1, %s11
    %p201 = scmp.lt.s32.totalorder %s11, 17
    %p202 = pnand %p200, %p201
    %p203 = pneg %p202
    // Predicated region
    $region37: #{_lambda_.6} parent=5 // pred_check
      _
    $region38: #{_lambda_.6} parent=5 // pred_check_branch
      %205 = sbr.rel (%p202) target = $region40
    $region39: #{_lambda_.6} parent=5 // pred_region
      %s206 = ssub.s32 %s11, 1
      %p207 = scmp.lt.s32.totalorder %s20, 1
      %s208 = scalar_select %p207, %s20, 1
      %s209 = smul.addr %s208, 20
      %s210 = smul.addr %s209, 4
      %s211 = scalar_lea.vmem %s0, %s210
      %p212 = pneg %p49
      %p213 = pneg %p46
      %p214 = pneg %p70
      %p215 = pneg %p67
      %p216 = pneg %p91
      %p217 = pneg %p88
      %p218 = pneg %p112
      %p219 = pneg %p109
      %p220 = pneg %p133
      %p221 = pneg %p130
      %p222 = pneg %p161
      %p223 = pneg %p158
      %p224 = scmp.lt.s32.totalorder %s20, 1
      %s225 = scalar_select %p224, %s20, 1
      %p226 = scmp.lt.s32.totalorder %s21, 7
      %s227 = scalar_select %p226, %s21, 7
      %s228 = smul.addr %s225, 8
      %s229 = sadd.s32 %s227, %s228
      %s230 = smul.addr %s229, 4
      %s231 = scalar_lea.vmem %s5, %s230
      %p232 = scmp.lt.s32.totalorder %s20, 1
      %s233 = scalar_select %p232, %s20, 1
      %s234 = smul.addr %s233, 20
      %s235 = smul.addr %s234, 4
      %s236 = scalar_lea.vmem %s0, %s235
      %p237 = scmp.lt.s32.totalorder %s20, 1
      %s238 = scalar_select %p237, %s20, 1
      %p239 = scmp.lt.s32.totalorder %s21, 7
      %s240 = scalar_select %p239, %s21, 7
      %s241 = smul.addr %s238, 8
      %s242 = sadd.s32 %s240, %s241
      %s243 = smul.addr %s242, 4
      %s244 = scalar_lea.vmem %s5, %s243
      %v246 = vld [vmem:[%s1] sm:$0xf]
      %v247 = vld [vmem:[%s1 + $0x4] sm:$0x1]
      %v248 = vunpack.c.l.bf16 %v246
      %v249 = vunpack.c.l.bf16 %v247
      %s250 = smul.u32 %s21, 2
      %s251 = smul.addr %s250, 4
      %s252 = scalar_lea.vmem %s236, %s251
      %v253 = vld [vmem:[%s252] sm:$0xf]
      %v254 = vld [vmem:[%s252 + $0x4] sm:$0x1]
      %v255 = vunpack.c.l.bf16 %v253
      %v256 = vunpack.c.l.bf16 %v254
      %v257 = vlaneseq
      %v258 = vshrl.u32 %v257, 7
      %v259 = vsub.s32 0, %v258
      %v260 = vrot.slane %v248, %v259
      %v261 = vmul.f32 %v255, %v260
      %v262 = vadd.f32 %v261, 0.0
      %v263 = vlaneseq
      %v264 = vshrl.u32 %v263, 7
      %v265 = vsub.s32 1, %v264
      %v266 = vrot.slane %v248, %v265
      %v267 = vmul.f32 %v255, %v266
      %v268 = vmul.f32 %v256, %v266
      %vm271 = vcmask 1046528
      %v272 = vrot.slane %v267, 1
      %v273 = vrot.slane %v268, 1
      %v274 = vsel %vm271, %v272, %v273
      %v276 = vadd.f32 %v262, %v274
      %v277 = vlaneseq
      %v278 = vshrl.u32 %v277, 7
      %v279 = vsub.s32 2, %v278
      %v280 = vrot.slane %v248, %v279
      %v281 = vmul.f32 %v255, %v280
      %v282 = vmul.f32 %v256, %v280
      %vm285 = vcmask 1045504
      %v286 = vrot.slane %v281, 2
      %v287 = vrot.slane %v282, 2
      %v288 = vsel %vm285, %v286, %v287
      %v290 = vadd.f32 %v276, %v288
      %s291 = sadd.s32 %s21, 1
      %s292 = smul.u32 %s291, 2
      %s293 = smul.addr %s292, 4
      %s294 = scalar_lea.vmem %s236, %s293
      %v295 = vld [vmem:[%s294] sm:$0xf]
      %v296 = vld [vmem:[%s294 + $0x4] sm:$0x1]
      %v297 = vunpack.c.l.bf16 %v295
      %v298 = vunpack.c.l.bf16 %v296
      %v299 = vlaneseq
      %v300 = vshrl.u32 %v299, 7
      %v301 = vsub.s32 3, %v300
      %v302 = vrot.slane %v248, %v301
      %v303 = vmul.f32 %v297, %v302
      %v304 = vadd.f32 %v290, %v303
      %v305 = vlaneseq
      %v306 = vshrl.u32 %v305, 7
      %v307 = vsub.s32 4, %v306
      %v308 = vrot.slane %v248, %v307
      %v309 = vmul.f32 %v297, %v308
      %v310 = vmul.f32 %v298, %v308
      %v313 = vrot.slane %v309, 1
      %v314 = vrot.slane %v310, 1
      %v315 = vsel %vm271, %v313, %v314
      %v317 = vadd.f32 %v304, %v315
      %v318 = vlaneseq
      %v319 = vshrl.u32 %v318, 7
      %v320 = vsub.s32 5, %v319
      %v321 = vrot.slane %v248, %v320
      %v322 = vmul.f32 %v297, %v321
      %v323 = vmul.f32 %v298, %v321
      %v326 = vrot.slane %v322, 2
      %v327 = vrot.slane %v323, 2
      %v328 = vsel %vm285, %v326, %v327
      %v330 = vadd.f32 %v317, %v328
      %s331 = sadd.s32 %s21, 2
      %s332 = smul.u32 %s331, 2
      %s333 = smul.addr %s332, 4
      %s334 = scalar_lea.vmem %s236, %s333
      %v335 = vld [vmem:[%s334] sm:$0xf]
      %v336 = vld [vmem:[%s334 + $0x4] sm:$0x1]
      %v337 = vunpack.c.l.bf16 %v335
      %v338 = vunpack.c.l.bf16 %v336
      %v339 = vlaneseq
      %v340 = vshrl.u32 %v339, 7
      %v341 = vsub.s32 6, %v340
      %v342 = vrot.slane %v248, %v341
      %v343 = vmul.f32 %v337, %v342
      %v344 = vadd.f32 %v330, %v343
      %v345 = vlaneseq
      %v346 = vshrl.u32 %v345, 7
      %v347 = vsub.s32 7, %v346
      %v348 = vrot.slane %v248, %v347
      %v349 = vmul.f32 %v337, %v348
      %v350 = vmul.f32 %v338, %v348
      %v353 = vrot.slane %v349, 1
      %v354 = vrot.slane %v350, 1
      %v355 = vsel %vm271, %v353, %v354
      %v357 = vadd.f32 %v344, %v355
      %v358 = vlaneseq
      %v359 = vshrl.u32 %v358, 7
      %v360 = vsub.s32 0, %v359
      %v361 = vrot.slane %v249, %v360
      %v362 = vmul.f32 %v337, %v361
      %v363 = vmul.f32 %v338, %v361
      %v366 = vrot.slane %v362, 2
      %v367 = vrot.slane %v363, 2
      %v368 = vsel %vm285, %v366, %v367
      %v370 = vadd.f32 %v357, %v368
      %v371 = vld [vmem:[%s2] sm:$0x1]
      %v373 = vlaneseq
      %v374 = vshrl.u32 %v373, 7
      %v375 = vsub.s32 0, %v374
      %v376 = vrot.slane %v371, %v375
      %v378 = vadd.f32 %v370, %v376
      %v379 = vmax.f32 %v378, 0.0
      %v380 = vpack.c.bf16 %v379, %v379
      %v381 = vld [vmem:[%s3] sm:$0xf]
      %v382 = vld [vmem:[%s4] sm:$0x1]
      %v384 = vlaneseq
      %v385 = vshrl.u32 %v384, 7
      %v386 = vsub.s32 0, %v385
      %v387 = vrot.slane %v382, %v386
      %vm389 = vcmask 64512
      %v391 = vsel %vm389, %v380, 0
      %vm393 = vcmask 1043456
      %v395 = vsel %vm393, %v381, 0
      %397 = vmatprep.subr.bf16.mxu0 0
      %398 = vmatpush1.bf16.msra.mxu0 %v395
      %399 = vmatprep.subr.bf16.mxu0 0
      %400 = vmatpush1.bf16.msra.mxu0 0
      %401 = vmatprep.subr.bf16.mxu0 0
      %402 = vmatpush1.bf16.msra.mxu0 0
      %403 = vmatprep.subr.bf16.mxu0 0
      %404 = vmatpush1.bf16.msra.mxu0 0
      %405 = vmatprep.subr.bf16.mxu0 0
      %406 = vmatpush1.bf16.msra.mxu0 0
      %407 = vmatprep.subr.bf16.mxu0 0
      %408 = vmatpush1.bf16.msra.mxu0 0
      %409 = vmatprep.subr.bf16.mxu0 0
      %410 = vmatpush1.bf16.msra.mxu0 0
      %411 = vmatprep.subr.bf16.mxu0 0
      %412 = vmatpush1.bf16.msra.mxu0 0
      %413 = vmatprep.subr.bf16.mxu0 0
      %414 = vmatpush1.bf16.msra.mxu0 0
      %415 = vmatprep.subr.bf16.mxu0 0
      %416 = vmatpush1.bf16.msra.mxu0 0
      %417 = vmatprep.subr.bf16.mxu0 0
      %418 = vmatpush1.bf16.msra.mxu0 0
      %419 = vmatprep.subr.bf16.mxu0 0
      %420 = vmatpush1.bf16.msra.mxu0 0
      %421 = vmatprep.subr.bf16.mxu0 0
      %422 = vmatpush1.bf16.msra.mxu0 0
      %423 = vmatprep.subr.bf16.mxu0 0
      %424 = vmatpush1.bf16.msra.mxu0 0
      %425 = vmatprep.subr.bf16.mxu0 0
      %426 = vmatpush1.bf16.msra.mxu0 0
      %427 = vmatprep.subr.bf16.mxu0 0
      %428 = vmatpush1.bf16.msra.mxu0 0
      %429 = vmatprep.mubr.bf16.mxu0 0
      %430 = vmatmul.mubr.bf16.gmra.mrb[0].mxu0 %v391
      %v431 = vpop.f32.mrb[0].mxu0
      %v432 = vadd.f32 %v387, %v431
      %v433 = vpop.f32.mrb[0].mxu0
      %v434 = vpop.f32.mrb[0].mxu0
      %v435 = vpop.f32.mrb[0].mxu0
      %436 = vdwg.mxu0
      %v437 = vmax.f32 %v432, 0.0
      %v438 = vpack.c.bf16 %v437, %v437
      %vm439 = vcmask 125952
      %440 = vst.msk [vmem:[%s244] sm:$0xf] %vm439, %v438
      %p441 = scmp.lt.s32.totalorder %s20, 1
      %s442 = scalar_select %p441, %s20, 1
      %p443 = scmp.lt.s32.totalorder %s21, 7
      %s444 = scalar_select %p443, %s21, 7
      %s445 = smul.addr %s442, 8
      %s446 = sadd.s32 %s444, %s445
      %s447 = smul.addr %s446, 4
      %s448 = scalar_lea.vmem %s5, %s447
      // Predicated region
      $region41: #{_lambda_.6} parent=39 // pred_check
        %p449 = pneg %p158
      $region42: #{_lambda_.6} parent=39 // pred_check_branch
        %451 = sbr.rel (%p449) target = $region44
      $region43: #{_lambda_.6} parent=39 // pred_region
        _
      $region44: #{_lambda_.6} parent=39 // pred_fallthru
        _
    $region40: #{_lambda_.6} parent=5 // pred_fallthru
      _
    %p452 = scmp.le.s32.totalorder 2, %s11
    // Predicated region
    $region45: #{_lambda_.6} parent=5 // pred_check
      %p453 = pneg %p452
    $region46: #{_lambda_.6} parent=5 // pred_check_branch
      %455 = sbr.rel (%p453) target = $region48
    $region47: #{_lambda_.6} parent=5 // pred_region
      %s456 = ssub.s32 %s11, 2
      // Predicated region
      $region49: #{_lambda_.6} parent=47 // pred_check
        %p457 = pneg %p164
      $region50: #{_lambda_.6} parent=47 // pred_check_branch
        %459 = sbr.rel (%p457) target = $region52
      $region51: #{_lambda_.6} parent=47 // pred_region
        %p460 = scmp.lt.s32.totalorder %s22, 1
        %s461 = scalar_select %p460, %s22, 1
        %p462 = scmp.lt.s32.totalorder %s23, 7
        %s463 = scalar_select %p462, %s23, 7
        %s464 = smul.addr %s461, 8
        %s465 = sadd.s32 %s463, %s464
        %s466 = smul.addr %s465, 4
        %s467 = scalar_lea.vmem %s5, %s466
      $region52: #{_lambda_.6} parent=47 // pred_fallthru
        _
    $region48: #{_lambda_.6} parent=5 // pred_fallthru
      _
  $region6: #{_lambda_.6} parent=0 // loop_footer
    %s15 = sadd.s32 1, %s11
  $region7: #{_lambda_.6} parent=0 // loop_footer_branch
    %10 = sbr.rel target = $region3
  $region8: #{_lambda_.6} parent=0 // loop_exit
    _

// kernel: _lambda_.5
$region0: #{_lambda_.5}
  #allocation0 [shape = 'u32[]', space=smem, size = 0x4, offset = 0x4, fixed_abs, tag = 'smem constant byte address 0x4 - core index']
  #allocation1 [shape = 'u32[144,128]{1,0:T(1,128)}', space=vmem, size = 0x12000, scoped, tag = 'internal scratch']
  %s0 = inlined_call_operand.vmem [shape: bf16[128,27], index: 0, kind: input, shape index: {}]
  %s1 = inlined_call_operand.vmem [shape: bf16[27,8], index: 1, kind: input, shape index: {}]
  %s2 = inlined_call_operand.vmem [shape: f32[1,8], index: 2, kind: input, shape index: {}]
  %s3 = inlined_call_operand.vmem [shape: bf16[128,8], index: 3, kind: output, shape index: {}]
  %s4 = sld [smem:[#allocation0]]
  $region22: #{_lambda_.5} parent=0
    _
  %s6 = ssub.s32 1, %s4
  %s7 = scalar_select 0, %s6, %s4
  // Predicated region
  $region2: #{_lambda_.5} parent=0 // pred_check
    _
  $region3: #{_lambda_.5} parent=0 // pred_check_branch
    %9 = sbr.rel (0) target = $region5
  $region4: #{_lambda_.5} parent=0 // pred_region
    _
  $region5: #{_lambda_.5} parent=0 // pred_fallthru
    _
  // Predicated region
  $region6: #{_lambda_.5} parent=0 // pred_check
    _
  $region7: #{_lambda_.5} parent=0 // pred_check_branch
    %11 = sbr.rel (0) target = $region9
  $region8: #{_lambda_.5} parent=0 // pred_region
    _
  $region9: #{_lambda_.5} parent=0 // pred_fallthru
    _
  // Predicated region
  $region10: #{_lambda_.5} parent=0 // pred_check
    _
  $region11: #{_lambda_.5} parent=0 // pred_check_branch
    %13 = sbr.rel (0) target = $region13
  $region12: #{_lambda_.5} parent=0 // pred_region
    _
  $region13: #{_lambda_.5} parent=0 // pred_fallthru
    _
  %v15 = vld [vmem:[%s0] sm:$0xf]
  %v16 = vld [vmem:[%s0 + $0x4] sm:$0xf]
  %v17 = vld [vmem:[%s0 + $0x8] sm:$0xf]
  %v18 = vld [vmem:[%s0 + $0xc] sm:$0xf]
  %v19 = vld [vmem:[%s0 + $0x10] sm:$0xf]
  %v20 = vld [vmem:[%s0 + $0x14] sm:$0xf]
  %v21 = vld [vmem:[%s0 + $0x18] sm:$0xf]
  %v22 = vld [vmem:[%s0 + $0x1c] sm:$0xf]
  %v23 = vld [vmem:[%s0 + $0x20] sm:$0xf]
  %v24 = vld [vmem:[%s0 + $0x24] sm:$0xf]
  %v25 = vld [vmem:[%s0 + $0x28] sm:$0xf]
  %v26 = vld [vmem:[%s0 + $0x2c] sm:$0xf]
  %v27 = vld [vmem:[%s0 + $0x30] sm:$0xf]
  %v28 = vld [vmem:[%s0 + $0x34] sm:$0xf]
  %v29 = vld [vmem:[%s0 + $0x38] sm:$0xf]
  %v30 = vld [vmem:[%s0 + $0x3c] sm:$0xf]
  %v31 = vld [vmem:[%s1] sm:$0xf]
  %v32 = vld [vmem:[%s1 + $0x4] sm:$0xf]
  %v33 = vld [vmem:[%s1 + $0x8] sm:$0xf]
  %v34 = vld [vmem:[%s1 + $0xc] sm:$0x3]
  %v35 = vld [vmem:[%s2] sm:$0x1]
  %v37 = vlaneseq
  %v38 = vshrl.u32 %v37, 7
  %v39 = vsub.s32 0, %v38
  %v40 = vrot.slane %v35, %v39
  %v58 = vunpack.c.l.b16 %v15
  %v59 = vunpack.c.l.b16 %v16
  %v60 = vunpack.c.l.b16 %v17
  %v61 = vunpack.c.l.b16 %v18
  %v62 = vunpack.c.l.b16 %v19
  %v63 = vunpack.c.l.b16 %v20
  %v64 = vunpack.c.l.b16 %v21
  %v65 = vunpack.c.l.b16 %v22
  %v66 = vunpack.c.l.b16 %v23
  %v67 = vunpack.c.l.b16 %v24
  %v68 = vunpack.c.l.b16 %v25
  %v69 = vunpack.c.l.b16 %v26
  %v70 = vunpack.c.l.b16 %v27
  %v71 = vunpack.c.l.b16 %v28
  %v72 = vunpack.c.l.b16 %v29
  %v73 = vunpack.c.l.b16 %v30
  %v74 = vpack.c.b16 %v59, %v58
  %v75 = vpack.c.b16 %v61, %v60
  %v76 = vpack.c.b16 %v63, %v62
  %v77 = vpack.c.b16 %v65, %v64
  %v78 = vpack.c.b16 %v67, %v66
  %v79 = vpack.c.b16 %v69, %v68
  %v80 = vpack.c.b16 %v71, %v70
  %v81 = vpack.c.b16 %v73, %v72
  %v86 = vunpack.c.l.b16 %v31
  %v87 = vunpack.c.l.b16 %v32
  %v88 = vunpack.c.l.b16 %v33
  %v89 = vunpack.c.l.b16 %v34
  %v90 = vpack.c.b16 %v87, %v86
  %v91 = vpack.c.b16 %v89, %v88
  %vm93 = vcmask 220160
  %v95 = vsel %vm93, %v74, 0
  %v98 = vsel %vm93, %v75, 0
  %v101 = vsel %vm93, %v76, 0
  %v104 = vsel %vm93, %v77, 0
  %v107 = vsel %vm93, %v78, 0
  %v110 = vsel %vm93, %v79, 0
  %v113 = vsel %vm93, %v80, 0
  %v116 = vsel %vm93, %v81, 0
  %vm118 = vcmask 1044480
  %vm119 = vcmask 1045504
  %v120 = vsel %vm118, 4294967295, 65535
  %v121 = vsel %vm119, %v120, 0
  %v123 = vand.u32 %v91, %v121
  %125 = vmatprep.subr.bf16.mxu0 0
  %126 = vmatpush1.bf16.msra.mxu0 %v90
  %127 = vmatprep.subr.bf16.mxu0 0
  %128 = vmatpush1.bf16.msra.mxu0 %v123
  %129 = vmatprep.subr.bf16.mxu0 0
  %130 = vmatpush1.bf16.msra.mxu0 0
  %131 = vmatprep.subr.bf16.mxu0 0
  %132 = vmatpush1.bf16.msra.mxu0 0
  %133 = vmatprep.subr.bf16.mxu0 0
  %134 = vmatpush1.bf16.msra.mxu0 0
  %135 = vmatprep.subr.bf16.mxu0 0
  %136 = vmatpush1.bf16.msra.mxu0 0
  %137 = vmatprep.subr.bf16.mxu0 0
  %138 = vmatpush1.bf16.msra.mxu0 0
  %139 = vmatprep.subr.bf16.mxu0 0
  %140 = vmatpush1.bf16.msra.mxu0 0
  %141 = vmatprep.subr.bf16.mxu0 0
  %142 = vmatpush1.bf16.msra.mxu0 0
  %143 = vmatprep.subr.bf16.mxu0 0
  %144 = vmatpush1.bf16.msra.mxu0 0
  %145 = vmatprep.subr.bf16.mxu0 0
  %146 = vmatpush1.bf16.msra.mxu0 0
  %147 = vmatprep.subr.bf16.mxu0 0
  %148 = vmatpush1.bf16.msra.mxu0 0
  %149 = vmatprep.subr.bf16.mxu0 0
  %150 = vmatpush1.bf16.msra.mxu0 0
  %151 = vmatprep.subr.bf16.mxu0 0
  %152 = vmatpush1.bf16.msra.mxu0 0
  %153 = vmatprep.subr.bf16.mxu0 0
  %154 = vmatpush1.bf16.msra.mxu0 0
  %155 = vmatprep.subr.bf16.mxu0 0
  %156 = vmatpush1.bf16.msra.mxu0 0
  %157 = vmatprep.mubr.bf16.mxu0 0
  %158 = vmatmul.mubr.bf16.gmra.mrb[0].mxu0 %v95
  %v159 = vpop.f32.mrb[0].mxu0
  %v160 = vadd.f32 %v40, %v159
  %v161 = vpop.f32.mrb[0].mxu0
  %v162 = vpop.f32.mrb[0].mxu0
  %v163 = vadd.f32 %v40, %v162
  %v164 = vpop.f32.mrb[0].mxu0
  %165 = vmatprep.mubr.bf16.mxu0 0
  %166 = vmatmul.mubr.bf16.gmra.mrb[0].mxu0 %v98
  %v167 = vpop.f32.mrb[0].mxu0
  %v168 = vadd.f32 %v40, %v167
  %v169 = vpop.f32.mrb[0].mxu0
  %v170 = vpop.f32.mrb[0].mxu0
  %v171 = vadd.f32 %v40, %v170
  %v172 = vpop.f32.mrb[0].mxu0
  %173 = vmatprep.mubr.bf16.mxu0 0
  %174 = vmatmul.mubr.bf16.gmra.mrb[0].mxu0 %v101
  %v175 = vpop.f32.mrb[0].mxu0
  %v176 = vadd.f32 %v40, %v175
  %v177 = vpop.f32.mrb[0].mxu0
  %v178 = vpop.f32.mrb[0].mxu0
  %v179 = vadd.f32 %v40, %v178
  %v180 = vpop.f32.mrb[0].mxu0
  %181 = vmatprep.mubr.bf16.mxu0 0
  %182 = vmatmul.mubr.bf16.gmra.mrb[0].mxu0 %v104
  %v183 = vpop.f32.mrb[0].mxu0
  %v184 = vadd.f32 %v40, %v183
  %v185 = vpop.f32.mrb[0].mxu0
  %v186 = vpop.f32.mrb[0].mxu0
  %v187 = vadd.f32 %v40, %v186
  %v188 = vpop.f32.mrb[0].mxu0
  %189 = vmatprep.mubr.bf16.mxu0 0
  %190 = vmatmul.mubr.bf16.gmra.mrb[0].mxu0 %v107
  %v191 = vpop.f32.mrb[0].mxu0
  %v192 = vadd.f32 %v40, %v191
  %v193 = vpop.f32.mrb[0].mxu0
  %v194 = vpop.f32.mrb[0].mxu0
  %v195 = vadd.f32 %v40, %v194
  %v196 = vpop.f32.mrb[0].mxu0
  %197 = vmatprep.mubr.bf16.mxu0 0
  %198 = vmatmul.mubr.bf16.gmra.mrb[0].mxu0 %v110
  %v199 = vpop.f32.mrb[0].mxu0
  %v200 = vadd.f32 %v40, %v199
  %v201 = vpop.f32.mrb[0].mxu0
  %v202 = vpop.f32.mrb[0].mxu0
  %v203 = vadd.f32 %v40, %v202
  %v204 = vpop.f32.mrb[0].mxu0
  %205 = vmatprep.mubr.bf16.mxu0 0
  %206 = vmatmul.mubr.bf16.gmra.mrb[0].mxu0 %v113
  %v207 = vpop.f32.mrb[0].mxu0
  %v208 = vadd.f32 %v40, %v207
  %v209 = vpop.f32.mrb[0].mxu0
  %v210 = vpop.f32.mrb[0].mxu0
  %v211 = vadd.f32 %v40, %v210
  %v212 = vpop.f32.mrb[0].mxu0
  %213 = vmatprep.mubr.bf16.mxu0 0
  %214 = vmatmul.mubr.bf16.gmra.mrb[0].mxu0 %v116
  %v215 = vpop.f32.mrb[0].mxu0
  %v216 = vadd.f32 %v40, %v215
  %v217 = vpop.f32.mrb[0].mxu0
  %v218 = vpop.f32.mrb[0].mxu0
  %v219 = vadd.f32 %v40, %v218
  %v220 = vpop.f32.mrb[0].mxu0
  %221 = vdwg.mxu0
  %v222 = vmax.f32 %v160, 0.0
  %v223 = vmax.f32 %v163, 0.0
  %v224 = vmax.f32 %v168, 0.0
  %v225 = vmax.f32 %v171, 0.0
  %v226 = vmax.f32 %v176, 0.0
  %v227 = vmax.f32 %v179, 0.0
  %v228 = vmax.f32 %v184, 0.0
  %v229 = vmax.f32 %v187, 0.0
  %v230 = vmax.f32 %v192, 0.0
  %v231 = vmax.f32 %v195, 0.0
  %v232 = vmax.f32 %v200, 0.0
  %v233 = vmax.f32 %v203, 0.0
  %v234 = vmax.f32 %v208, 0.0
  %v235 = vmax.f32 %v211, 0.0
  %v236 = vmax.f32 %v216, 0.0
  %v237 = vmax.f32 %v219, 0.0
  %v238 = vpack.c.bf16 %v223, %v222
  %v239 = vpack.c.bf16 %v225, %v224
  %v240 = vpack.c.bf16 %v227, %v226
  %v241 = vpack.c.bf16 %v229, %v228
  %v242 = vpack.c.bf16 %v231, %v230
  %v243 = vpack.c.bf16 %v233, %v232
  %v244 = vpack.c.bf16 %v235, %v234
  %v245 = vpack.c.bf16 %v237, %v236
  %v254 = vunpack.c.l.b16 %v238
  %v255 = vunpack.c.h.b16 %v238
  %v256 = vunpack.c.l.b16 %v239
  %v257 = vunpack.c.h.b16 %v239
  %v258 = vunpack.c.l.b16 %v240
  %v259 = vunpack.c.h.b16 %v240
  %v260 = vunpack.c.l.b16 %v241
  %v261 = vunpack.c.h.b16 %v241
  %v262 = vunpack.c.l.b16 %v242
  %v263 = vunpack.c.h.b16 %v242
  %v264 = vunpack.c.l.b16 %v243
  %v265 = vunpack.c.h.b16 %v243
  %v266 = vunpack.c.l.b16 %v244
  %v267 = vunpack.c.h.b16 %v244
  %v268 = vunpack.c.l.b16 %v245
  %v269 = vunpack.c.h.b16 %v245
  %v270 = vpack.c.b16 %v254, %v254
  %v271 = vpack.c.b16 %v255, %v255
  %v272 = vpack.c.b16 %v256, %v256
  %v273 = vpack.c.b16 %v257, %v257
  %v274 = vpack.c.b16 %v258, %v258
  %v275 = vpack.c.b16 %v259, %v259
  %v276 = vpack.c.b16 %v260, %v260
  %v277 = vpack.c.b16 %v261, %v261
  %v278 = vpack.c.b16 %v262, %v262
  %v279 = vpack.c.b16 %v263, %v263
  %v280 = vpack.c.b16 %v264, %v264
  %v281 = vpack.c.b16 %v265, %v265
  %v282 = vpack.c.b16 %v266, %v266
  %v283 = vpack.c.b16 %v267, %v267
  %v284 = vpack.c.b16 %v268, %v268
  %v285 = vpack.c.b16 %v269, %v269
  %vm302 = vcmask 60416
  %303 = vst.msk [vmem:[%s3] sm:$0xf] %vm302, %v270
  %304 = vst.msk [vmem:[%s3 + $0x4] sm:$0xf] %vm302, %v271
  %305 = vst.msk [vmem:[%s3 + $0x8] sm:$0xf] %vm302, %v272
  %306 = vst.msk [vmem:[%s3 + $0xc] sm:$0xf] %vm302, %v273
  %307 = vst.msk [vmem:[%s3 + $0x10] sm:$0xf] %vm302, %v274
  %308 = vst.msk [vmem:[%s3 + $0x14] sm:$0xf] %vm302, %v275
  %309 = vst.msk [vmem:[%s3 + $0x18] sm:$0xf] %vm302, %v276
  %310 = vst.msk [vmem:[%s3 + $0x1c] sm:$0xf] %vm302, %v277
  %311 = vst.msk [vmem:[%s3 + $0x20] sm:$0xf] %vm302, %v278
  %312 = vst.msk [vmem:[%s3 + $0x24] sm:$0xf] %vm302, %v279
  %313 = vst.msk [vmem:[%s3 + $0x28] sm:$0xf] %vm302, %v280
  %314 = vst.msk [vmem:[%s3 + $0x2c] sm:$0xf] %vm302, %v281
  %315 = vst.msk [vmem:[%s3 + $0x30] sm:$0xf] %vm302, %v282
  %316 = vst.msk [vmem:[%s3 + $0x34] sm:$0xf] %vm302, %v283
  %317 = vst.msk [vmem:[%s3 + $0x38] sm:$0xf] %vm302, %v284
  %318 = vst.msk [vmem:[%s3 + $0x3c] sm:$0xf] %vm302, %v285
  // Predicated region
  $region14: #{_lambda_.5} parent=0 // pred_check
    _
  $region15: #{_lambda_.5} parent=0 // pred_check_branch
    %320 = sbr.rel (0) target = $region17
  $region16: #{_lambda_.5} parent=0 // pred_region
    _
  $region17: #{_lambda_.5} parent=0 // pred_fallthru
    _
  // Predicated region
  $region18: #{_lambda_.5} parent=0 // pred_check
    _
  $region19: #{_lambda_.5} parent=0 // pred_check_branch
    %322 = sbr.rel (0) target = $region21
  $region20: #{_lambda_.5} parent=0 // pred_region
    _
  $region21: #{_lambda_.5} parent=0 // pred_fallthru
    _

// kernel: _lambda_.7
$region0: #{_lambda_.7}
  #allocation0 [shape = 'u32[]', space=smem, size = 0x4, offset = 0x4, fixed_abs, tag = 'smem constant byte address 0x4 - core index']
  #allocation1 [shape = 'u32[144,128]{1,0:T(1,128)}', space=vmem, size = 0x12000, scoped, tag = 'internal scratch']
  %s0 = inlined_call_operand.vmem [shape: bf16[8,5,5,16], index: 0, kind: input, shape index: {}]
  %s1 = inlined_call_operand.vmem [shape: bf16[9,16], index: 1, kind: input, shape index: {}]
  %s2 = inlined_call_operand.vmem [shape: f32[1,16], index: 2, kind: input, shape index: {}]
  %s3 = inlined_call_operand.vmem [shape: bf16[16,32], index: 3, kind: input, shape index: {}]
  %s4 = inlined_call_operand.vmem [shape: f32[1,32], index: 4, kind: input, shape index: {}]
  %s5 = inlined_call_operand.vmem [shape: bf16[2,4,4,32], index: 5, kind: output, shape index: {}]
  %s6 = sld [smem:[#allocation0]]
  $region53: #{_lambda_.7} parent=0
    _
  %s8 = ssub.s32 1, %s6
  %s9 = scalar_select 0, %s8, %s6
  loop: start=0, step=1, limit=10
  $region2: #{_lambda_.7} parent=0 // loop_pre_header
    _
  $region3: #{_lambda_.7} parent=0 // loop_header
    %s11 = sphi 0, %s15
    %p12 = scmp.ge.s32.totalorder %s11, 10
    %s18 = sphi 0, %s30
    %s19 = sphi 0, %s26
    %s20 = sphi 0, %s18
    %s21 = sphi 0, %s19
    %s22 = sphi 0, %s20
    %s23 = sphi 0, %s21
    %s33 = sphi 0, %s35
    %s36 = sphi 0, %s33
    %s37 = sphi 0, %s36
    %s53 = sphi 0, %s37
    %s57 = sphi 0, %s57
    %s59 = sphi 0, %s57
    %s60 = sphi 0, %s59
    %s74 = sphi 0, %s60
    %s78 = sphi 0, %s78
    %s80 = sphi 0, %s78
    %s81 = sphi 0, %s80
    %s95 = sphi 0, %s81
    %s99 = sphi 0, %s99
    %s101 = sphi 0, %s99
    %s102 = sphi 0, %s101
    %s116 = sphi 0, %s102
    %s120 = sphi 0, %s120
    %s122 = sphi 0, %s120
    %s123 = sphi 0, %s122
    %s137 = sphi 0, %s123
    %s145 = sphi 0, %s147
    %s148 = sphi 0, %s145
    %s149 = sphi 0, %s148
    %s165 = sphi 0, %s149
  $region4: #{_lambda_.7} parent=0 // loop_header_branch
    %14 = sbr.rel (%p12) target = $region8
  $region5: #{_lambda_.7} parent=0 // loop_body
    %s16 = ssub.s32 %s11, 1
    %s17 = ssub.s32 %s11, 2
    %s24 = sadd.s32 1, %s19
    %p25 = scmp.ge.s32.totalorder %s24, 4
    %s26 = scalar_select %p25, 0, %s24
    %s27 = sadd.s32 1, %s18
    %s28 = scalar_select %p25, %s27, %s18
    %p29 = scmp.ge.s32.totalorder %s28, 2
    %s30 = scalar_select %p29, 0, %s28
    %s31 = ssub.s32 %s18, %s30
    %p32 = scmp.eq.s32.totalorder %s31, 0
    %s34 = sadd.s32 %s33, 1
    %s35 = scalar_select %p32, %s33, %s34
    %p38 = pneg %p32
    %p39 = scmp.eq.s32.totalorder %s11, 7
    %p40 = por %p38, %p39
    %p41 = scmp.ne.s32.totalorder %s33, %s36
    %p42 = scmp.eq.s32.totalorder %s11, 0
    %p43 = por %p41, %p42
    %p44 = scmp.ne.s32.totalorder %s33, %s36
    %p45 = scmp.eq.s32.totalorder %s16, 7
    %p46 = por %p44, %p45
    %p47 = scmp.ne.s32.totalorder %s36, %s37
    %p48 = scmp.eq.s32.totalorder %s16, 0
    %p49 = por %p47, %p48
    %p50 = scmp.ne.s32.totalorder %s36, %s37
    %p51 = scmp.eq.s32.totalorder %s17, 7
    %p52 = por %p50, %p51
    %p54 = scmp.ne.s32.totalorder %s37, %s53
    %p55 = scmp.eq.s32.totalorder %s17, 0
    %p56 = por %p54, %p55
    %s58 = sadd.s32 %s57, 1
    %p61 = scmp.eq.s32.totalorder %s11, 7
    %p62 = scmp.ne.s32.totalorder %s57, %s59
    %p63 = scmp.eq.s32.totalorder %s11, 0
    %p64 = por %p62, %p63
    %p65 = scmp.ne.s32.totalorder %s57, %s59
    %p66 = scmp.eq.s32.totalorder %s16, 7
    %p67 = por %p65, %p66
    %p68 = scmp.ne.s32.totalorder %s59, %s60
    %p69 = scmp.eq.s32.totalorder %s16, 0
    %p70 = por %p68, %p69
    %p71 = scmp.ne.s32.totalorder %s59, %s60
    %p72 = scmp.eq.s32.totalorder %s17, 7
    %p73 = por %p71, %p72
    %p75 = scmp.ne.s32.totalorder %s60, %s74
    %p76 = scmp.eq.s32.totalorder %s17, 0
    %p77 = por %p75, %p76
    %s79 = sadd.s32 %s78, 1
    %p82 = scmp.eq.s32.totalorder %s11, 7
    %p83 = scmp.ne.s32.totalorder %s78, %s80
    %p84 = scmp.eq.s32.totalorder %s11, 0
    %p85 = por %p83, %p84
    %p86 = scmp.ne.s32.totalorder %s78, %s80
    %p87 = scmp.eq.s32.totalorder %s16, 7
    %p88 = por %p86, %p87
    %p89 = scmp.ne.s32.totalorder %s80, %s81
    %p90 = scmp.eq.s32.totalorder %s16, 0
    %p91 = por %p89, %p90
    %p92 = scmp.ne.s32.totalorder %s80, %s81
    %p93 = scmp.eq.s32.totalorder %s17, 7
    %p94 = por %p92, %p93
    %p96 = scmp.ne.s32.totalorder %s81, %s95
    %p97 = scmp.eq.s32.totalorder %s17, 0
    %p98 = por %p96, %p97
    %s100 = sadd.s32 %s99, 1
    %p103 = scmp.eq.s32.totalorder %s11, 7
    %p104 = scmp.ne.s32.totalorder %s99, %s101
    %p105 = scmp.eq.s32.totalorder %s11, 0
    %p106 = por %p104, %p105
    %p107 = scmp.ne.s32.totalorder %s99, %s101
    %p108 = scmp.eq.s32.totalorder %s16, 7
    %p109 = por %p107, %p108
    %p110 = scmp.ne.s32.totalorder %s101, %s102
    %p111 = scmp.eq.s32.totalorder %s16, 0
    %p112 = por %p110, %p111
    %p113 = scmp.ne.s32.totalorder %s101, %s102
    %p114 = scmp.eq.s32.totalorder %s17, 7
    %p115 = por %p113, %p114
    %p117 = scmp.ne.s32.totalorder %s102, %s116
    %p118 = scmp.eq.s32.totalorder %s17, 0
    %p119 = por %p117, %p118
    %s121 = sadd.s32 %s120, 1
    %p124 = scmp.eq.s32.totalorder %s11, 7
    %p125 = scmp.ne.s32.totalorder %s120, %s122
    %p126 = scmp.eq.s32.totalorder %s11, 0
    %p127 = por %p125, %p126
    %p128 = scmp.ne.s32.totalorder %s120, %s122
    %p129 = scmp.eq.s32.totalorder %s16, 7
    %p130 = por %p128, %p129
    %p131 = scmp.ne.s32.totalorder %s122, %s123
    %p132 = scmp.eq.s32.totalorder %s16, 0
    %p133 = por %p131, %p132
    %p134 = scmp.ne.s32.totalorder %s122, %s123
    %p135 = scmp.eq.s32.totalorder %s17, 7
    %p136 = por %p134, %p135
    %p138 = scmp.ne.s32.totalorder %s123, %s137
    %p139 = scmp.eq.s32.totalorder %s17, 0
    %p140 = por %p138, %p139
    %s141 = ssub.s32 %s18, %s30
    %s142 = ssub.s32 %s19, %s26
    %s143 = sor.u32 %s141, %s142
    %p144 = scmp.eq.s32.totalorder %s143, 0
    %s146 = sadd.s32 %s145, 1
    %s147 = scalar_select %p144, %s145, %s146
    %p150 = pneg %p144
    %p151 = scmp.eq.s32.totalorder %s11, 7
    %p152 = por %p150, %p151
    %p153 = scmp.ne.s32.totalorder %s145, %s148
    %p154 = scmp.eq.s32.totalorder %s11, 0
    %p155 = por %p153, %p154
    %p156 = scmp.ne.s32.totalorder %s145, %s148
    %p157 = scmp.eq.s32.totalorder %s16, 7
    %p158 = por %p156, %p157
    %p159 = scmp.ne.s32.totalorder %s148, %s149
    %p160 = scmp.eq.s32.totalorder %s16, 0
    %p161 = por %p159, %p160
    %p162 = scmp.ne.s32.totalorder %s148, %s149
    %p163 = scmp.eq.s32.totalorder %s17, 7
    %p164 = por %p162, %p163
    %p166 = scmp.ne.s32.totalorder %s149, %s165
    %p167 = scmp.eq.s32.totalorder %s17, 0
    %p168 = por %p166, %p167
    %p169 = scmp.le.s32.totalorder 1, %s11
    %p170 = scmp.lt.s32.totalorder %s11, 9
    %p171 = pnand %p169, %p170
    %p172 = pneg %p171
    // Predicated region
    $region9: #{_lambda_.7} parent=5 // pred_check
      _
    $region10: #{_lambda_.7} parent=5 // pred_check_branch
      %174 = sbr.rel (%p171) target = $region12
    $region11: #{_lambda_.7} parent=5 // pred_region
      %s175 = ssub.s32 %s11, 1
      // Predicated region
      $region13: #{_lambda_.7} parent=11 // pred_check
        %p176 = pneg %p70
      $region14: #{_lambda_.7} parent=11 // pred_check_branch
        %178 = sbr.rel (%p176) target = $region16
      $region15: #{_lambda_.7} parent=11 // pred_region
        _
      $region16: #{_lambda_.7} parent=11 // pred_fallthru
        _
      // Predicated region
      $region17: #{_lambda_.7} parent=11 // pred_check
        %p179 = pneg %p91
      $region18: #{_lambda_.7} parent=11 // pred_check_branch
        %181 = sbr.rel (%p179) target = $region20
      $region19: #{_lambda_.7} parent=11 // pred_region
        _
      $region20: #{_lambda_.7} parent=11 // pred_fallthru
        _
      // Predicated region
      $region21: #{_lambda_.7} parent=11 // pred_check
        %p182 = pneg %p112
      $region22: #{_lambda_.7} parent=11 // pred_check_branch
        %184 = sbr.rel (%p182) target = $region24
      $region23: #{_lambda_.7} parent=11 // pred_region
        _
      $region24: #{_lambda_.7} parent=11 // pred_fallthru
        _
      // Predicated region
      $region25: #{_lambda_.7} parent=11 // pred_check
        %p185 = pneg %p133
      $region26: #{_lambda_.7} parent=11 // pred_check_branch
        %187 = sbr.rel (%p185) target = $region28
      $region27: #{_lambda_.7} parent=11 // pred_region
        _
      $region28: #{_lambda_.7} parent=11 // pred_fallthru
        _
    $region12: #{_lambda_.7} parent=5 // pred_fallthru
      _
    %p188 = scmp.lt.s32.totalorder %s11, 8
    // Predicated region
    $region29: #{_lambda_.7} parent=5 // pred_check
      %p189 = pneg %p188
    $region30: #{_lambda_.7} parent=5 // pred_check_branch
      %191 = sbr.rel (%p189) target = $region32
    $region31: #{_lambda_.7} parent=5 // pred_region
      // Predicated region
      $region33: #{_lambda_.7} parent=31 // pred_check
        %p192 = pneg %p43
      $region34: #{_lambda_.7} parent=31 // pred_check_branch
        %194 = sbr.rel (%p192) target = $region36
      $region35: #{_lambda_.7} parent=31 // pred_region
        %s195 = smul.u32 4, %s18
        %p196 = scmp.lt.s32.totalorder %s195, 7
        %s197 = scalar_select %p196, %s195, 7
        %s198 = smul.addr %s197, 5
        %s199 = smul.addr %s198, 4
        %s200 = scalar_lea.vmem %s0, %s199
        %s201 = smul.u32 4, %s18
      $region36: #{_lambda_.7} parent=31 // pred_fallthru
        _
    $region32: #{_lambda_.7} parent=5 // pred_fallthru
      _
    %p202 = scmp.le.s32.totalorder 1, %s11
    %p203 = scmp.lt.s32.totalorder %s11, 9
    %p204 = pnand %p202, %p203
    %p205 = pneg %p204
    // Predicated region
    $region37: #{_lambda_.7} parent=5 // pred_check
      _
    $region38: #{_lambda_.7} parent=5 // pred_check_branch
      %207 = sbr.rel (%p204) target = $region40
    $region39: #{_lambda_.7} parent=5 // pred_region
      %s208 = ssub.s32 %s11, 1
      %s209 = smul.u32 4, %s20
      %p210 = scmp.lt.s32.totalorder %s209, 7
      %s211 = scalar_select %p210, %s209, 7
      %s212 = smul.addr %s211, 5
      %s213 = smul.addr %s212, 4
      %s214 = scalar_lea.vmem %s0, %s213
      %p215 = pneg %p49
      %p216 = pneg %p46
      %p217 = pneg %p70
      %p218 = pneg %p67
      %p219 = pneg %p91
      %p220 = pneg %p88
      %p221 = pneg %p112
      %p222 = pneg %p109
      %p223 = pneg %p133
      %p224 = pneg %p130
      %p225 = pneg %p161
      %p226 = pneg %p158
      %p227 = scmp.lt.s32.totalorder %s20, 1
      %s228 = scalar_select %p227, %s20, 1
      %p229 = scmp.lt.s32.totalorder %s21, 3
      %s230 = scalar_select %p229, %s21, 3
      %s231 = smul.addr %s228, 4
      %s232 = sadd.s32 %s230, %s231
      %s233 = smul.addr %s232, 2
      %s234 = scalar_lea.vmem %s5, %s233
      %s235 = smul.u32 4, %s20
      %p236 = scmp.lt.s32.totalorder %s235, 7
      %s237 = scalar_select %p236, %s235, 7
      %s238 = smul.addr %s237, 5
      %s239 = smul.addr %s238, 4
      %s240 = scalar_lea.vmem %s0, %s239
      %s241 = smul.u32 4, %s20
      %p242 = scmp.lt.s32.totalorder %s20, 1
      %s243 = scalar_select %p242, %s20, 1
      %p244 = scmp.lt.s32.totalorder %s21, 3
      %s245 = scalar_select %p244, %s21, 3
      %s246 = smul.addr %s243, 4
      %s247 = sadd.s32 %s245, %s246
      %s248 = smul.addr %s247, 2
      %s249 = scalar_lea.vmem %s5, %s248
      %v251 = vld [vmem:[%s1] sm:$0xf]
      %v252 = vld [vmem:[%s1 + $0x4] sm:$0x1]
      %v253 = vunpack.c.l.bf16 %v251
      %v254 = vunpack.c.l.bf16 %v252
      %s255 = smul.addr %s21, 4
      %s256 = scalar_lea.vmem %s240, %s255
      %v257 = vld [vmem:[%s256] sm:$0x7]
      %v258 = vunpack.c.l.bf16 %v257
      %s259 = sadd.s32 %s21, 5
      %s260 = smul.addr %s259, 4
      %s261 = scalar_lea.vmem %s240, %s260
      %v262 = vld [vmem:[%s261] sm:$0x7]
      %v263 = vunpack.c.l.bf16 %v262
      %v264 = vlaneseq
      %v265 = vshrl.u32 %v264, 7
      %v266 = vsub.s32 0, %v265
      %v267 = vrot.slane %v253, %v266
      %v268 = vmul.f32 %v258, %v267
      %v269 = vadd.f32 %v268, 0.0
      %v270 = vlaneseq
      %v271 = vshrl.u32 %v270, 7
      %v272 = vsub.s32 1, %v271
      %v273 = vrot.slane %v253, %v272
      %v274 = vmul.f32 %v263, %v273
      %v275 = vadd.f32 %v269, %v274
      %v276 = vlaneseq
      %v277 = vshrl.u32 %v276, 7
      %v278 = vsub.s32 2, %v277
      %v279 = vrot.slane %v253, %v278
      %v280 = vmul.f32 %v258, %v279
      %v282 = vrot.slane %v280, 1
      %v284 = vadd.f32 %v275, %v282
      %s285 = sadd.s32 %s21, 10
      %s286 = smul.addr %s285, 4
      %s287 = scalar_lea.vmem %s240, %s286
      %v288 = vld [vmem:[%s287] sm:$0x7]
      %v289 = vunpack.c.l.bf16 %v288
      %s290 = sadd.s32 %s21, 15
      %s291 = smul.addr %s290, 4
      %s292 = scalar_lea.vmem %s240, %s291
      %v293 = vld [vmem:[%s292] sm:$0x7]
      %v294 = vunpack.c.l.bf16 %v293
      %v295 = vlaneseq
      %v296 = vshrl.u32 %v295, 7
      %v297 = vsub.s32 3, %v296
      %v298 = vrot.slane %v253, %v297
      %v299 = vmul.f32 %v289, %v298
      %v300 = vadd.f32 %v284, %v299
      %v301 = vlaneseq
      %v302 = vshrl.u32 %v301, 7
      %v303 = vsub.s32 4, %v302
      %v304 = vrot.slane %v253, %v303
      %v305 = vmul.f32 %v294, %v304
      %v306 = vadd.f32 %v300, %v305
      %v307 = vlaneseq
      %v308 = vshrl.u32 %v307, 7
      %v309 = vsub.s32 5, %v308
      %v310 = vrot.slane %v253, %v309
      %v311 = vmul.f32 %v289, %v310
      %v313 = vrot.slane %v311, 1
      %v315 = vadd.f32 %v306, %v313
      %s316 = sadd.s32 %s21, 1
      %s317 = smul.addr %s316, 4
      %s318 = scalar_lea.vmem %s240, %s317
      %v319 = vld [vmem:[%s318] sm:$0x7]
      %v320 = vunpack.c.l.bf16 %v319
      %s321 = sadd.s32 %s316, 5
      %s322 = smul.addr %s321, 4
      %s323 = scalar_lea.vmem %s240, %s322
      %v324 = vld [vmem:[%s323] sm:$0x7]
      %v325 = vunpack.c.l.bf16 %v324
      %v326 = vlaneseq
      %v327 = vshrl.u32 %v326, 7
      %v328 = vsub.s32 6, %v327
      %v329 = vrot.slane %v253, %v328
      %v330 = vmul.f32 %v320, %v329
      %v331 = vadd.f32 %v315, %v330
      %v332 = vlaneseq
      %v333 = vshrl.u32 %v332, 7
      %v334 = vsub.s32 7, %v333
      %v335 = vrot.slane %v253, %v334
      %v336 = vmul.f32 %v325, %v335
      %v337 = vadd.f32 %v331, %v336
      %v338 = vlaneseq
      %v339 = vshrl.u32 %v338, 7
      %v340 = vsub.s32 0, %v339
      %v341 = vrot.slane %v254, %v340
      %v342 = vmul.f32 %v320, %v341
      %v344 = vrot.slane %v342, 1
      %v346 = vadd.f32 %v337, %v344
      %v347 = vld [vmem:[%s2] sm:$0x1]
      %v349 = vlaneseq
      %v350 = vshrl.u32 %v349, 7
      %v351 = vsub.s32 0, %v350
      %v352 = vrot.slane %v347, %v351
      %v354 = vadd.f32 %v346, %v352
      %v355 = vmax.f32 %v354, 0.0
      %v356 = vpack.c.bf16 %v355, %v355
      %v357 = vld [vmem:[%s3] sm:$0xf]
      %v358 = vld [vmem:[%s3 + $0x4] sm:$0xf]
      %v359 = vld [vmem:[%s4] sm:$0x1]
      %v361 = vlaneseq
      %v362 = vshrl.u32 %v361, 7
      %v363 = vsub.s32 0, %v362
      %v364 = vrot.slane %v359, %v363
      %v368 = vunpack.c.l.b16 %v357
      %v369 = vunpack.c.l.b16 %v358
      %v370 = vpack.c.b16 %v369, %v368
      %vm372 = vcmask 130048
      %v374 = vsel %vm372, %v356, 0
      %376 = vmatprep.subr.bf16.mxu0 0
      %377 = vmatpush1.bf16.msra.mxu0 %v370
      %378 = vmatprep.subr.bf16.mxu0 0
      %379 = vmatpush1.bf16.msra.mxu0 0
      %380 = vmatprep.subr.bf16.mxu0 0
      %381 = vmatpush1.bf16.msra.mxu0 0
      %382 = vmatprep.subr.bf16.mxu0 0
      %383 = vmatpush1.bf16.msra.mxu0 0
      %384 = vmatprep.subr.bf16.mxu0 0
      %385 = vmatpush1.bf16.msra.mxu0 0
      %386 = vmatprep.subr.bf16.mxu0 0
      %387 = vmatpush1.bf16.msra.mxu0 0
      %388 = vmatprep.subr.bf16.mxu0 0
      %389 = vmatpush1.bf16.msra.mxu0 0
      %390 = vmatprep.subr.bf16.mxu0 0
      %391 = vmatpush1.bf16.msra.mxu0 0
      %392 = vmatprep.subr.bf16.mxu0 0
      %393 = vmatpush1.bf16.msra.mxu0 0
      %394 = vmatprep.subr.bf16.mxu0 0
      %395 = vmatpush1.bf16.msra.mxu0 0
      %396 = vmatprep.subr.bf16.mxu0 0
      %397 = vmatpush1.bf16.msra.mxu0 0
      %398 = vmatprep.subr.bf16.mxu0 0
      %399 = vmatpush1.bf16.msra.mxu0 0
      %400 = vmatprep.subr.bf16.mxu0 0
      %401 = vmatpush1.bf16.msra.mxu0 0
      %402 = vmatprep.subr.bf16.mxu0 0
      %403 = vmatpush1.bf16.msra.mxu0 0
      %404 = vmatprep.subr.bf16.mxu0 0
      %405 = vmatpush1.bf16.msra.mxu0 0
      %406 = vmatprep.subr.bf16.mxu0 0
      %407 = vmatpush1.bf16.msra.mxu0 0
      %408 = vmatprep.mubr.bf16.mxu0 0
      %409 = vmatmul.mubr.bf16.gmra.mrb[0].mxu0 %v374
      %v410 = vpop.f32.mrb[0].mxu0
      %v411 = vadd.f32 %v364, %v410
      %v412 = vpop.f32.mrb[0].mxu0
      %v413 = vpop.f32.mrb[0].mxu0
      %v414 = vpop.f32.mrb[0].mxu0
      %415 = vdwg.mxu0
      %v416 = vmax.f32 %v411, 0.0
      %v417 = vpack.c.bf16 %v416, %v416
      %vm418 = vcmask 254976
      %419 = vst.msk [vmem:[%s249] sm:$0x3] %vm418, %v417
      %p420 = scmp.lt.s32.totalorder %s20, 1
      %s421 = scalar_select %p420, %s20, 1
      %p422 = scmp.lt.s32.totalorder %s21, 3
      %s423 = scalar_select %p422, %s21, 3
      %s424 = smul.addr %s421, 4
      %s425 = sadd.s32 %s423, %s424
      %s426 = smul.addr %s425, 2
      %s427 = scalar_lea.vmem %s5, %s426
      // Predicated region
      $region41: #{_lambda_.7} parent=39 // pred_check
        %p428 = pneg %p158
      $region42: #{_lambda_.7} parent=39 // pred_check_branch
        %430 = sbr.rel (%p428) target = $region44
      $region43: #{_lambda_.7} parent=39 // pred_region
        _
      $region44: #{_lambda_.7} parent=39 // pred_fallthru
        _
    $region40: #{_lambda_.7} parent=5 // pred_fallthru
      _
    %p431 = scmp.le.s32.totalorder 2, %s11
    // Predicated region
    $region45: #{_lambda_.7} parent=5 // pred_check
      %p432 = pneg %p431
    $region46: #{_lambda_.7} parent=5 // pred_check_branch
      %434 = sbr.rel (%p432) target = $region48
    $region47: #{_lambda_.7} parent=5 // pred_region
      %s435 = ssub.s32 %s11, 2
      // Predicated region
      $region49: #{_lambda_.7} parent=47 // pred_check
        %p436 = pneg %p164
      $region50: #{_lambda_.7} parent=47 // pred_check_branch
        %438 = sbr.rel (%p436) target = $region52
      $region51: #{_lambda_.7} parent=47 // pred_region
        %p439 = scmp.lt.s32.totalorder %s22, 1
        %s440 = scalar_select %p439, %s22, 1
        %p441 = scmp.lt.s32.totalorder %s23, 3
        %s442 = scalar_select %p441, %s23, 3
        %s443 = smul.addr %s440, 4
        %s444 = sadd.s32 %s442, %s443
        %s445 = smul.addr %s444, 2
        %s446 = scalar_lea.vmem %s5, %s445
      $region52: #{_lambda_.7} parent=47 // pred_fallthru
        _
    $region48: #{_lambda_.7} parent=5 // pred_fallthru
      _
  $region6: #{_lambda_.7} parent=0 // loop_footer
    %s15 = sadd.s32 1, %s11
  $region7: #{_lambda_.7} parent=0 // loop_footer_branch
    %10 = sbr.rel target = $region3
  $region8: #{_lambda_.7} parent=0 // loop_exit
    _

// kernel: _lambda_.8
$region0: #{_lambda_.8}
  #allocation0 [shape = 'u32[]', space=smem, size = 0x4, offset = 0x4, fixed_abs, tag = 'smem constant byte address 0x4 - core index']
  #allocation1 [shape = 'u32[144,128]{1,0:T(1,128)}', space=vmem, size = 0x12000, scoped, tag = 'internal scratch']
  %s0 = inlined_call_operand.vmem [shape: bf16[2,6,6,32], index: 0, kind: input, shape index: {}]
  %s1 = inlined_call_operand.vmem [shape: bf16[9,32], index: 1, kind: input, shape index: {}]
  %s2 = inlined_call_operand.vmem [shape: f32[1,32], index: 2, kind: input, shape index: {}, may-alias: {2,4}]
  %s3 = inlined_call_operand.vmem [shape: bf16[32,32], index: 3, kind: input, shape index: {}]
  %s4 = inlined_call_operand.vmem [shape: f32[1,32], index: 4, kind: input, shape index: {}, may-alias: {2,4}]
  %s5 = inlined_call_operand.vmem [shape: bf16[2,4,4,32], index: 5, kind: output, shape index: {}]
  %s6 = sld [smem:[#allocation0]]
  $region53: #{_lambda_.8} parent=0
    _
  %s8 = ssub.s32 1, %s6
  %s9 = scalar_select 0, %s8, %s6
  loop: start=0, step=1, limit=10
  $region2: #{_lambda_.8} parent=0 // loop_pre_header
    _
  $region3: #{_lambda_.8} parent=0 // loop_header
    %s11 = sphi 0, %s15
    %p12 = scmp.ge.s32.totalorder %s11, 10
    %s18 = sphi 0, %s30
    %s19 = sphi 0, %s26
    %s20 = sphi 0, %s18
    %s21 = sphi 0, %s19
    %s22 = sphi 0, %s20
    %s23 = sphi 0, %s21
    %s33 = sphi 0, %s35
    %s36 = sphi 0, %s33
    %s37 = sphi 0, %s36
    %s53 = sphi 0, %s37
    %s57 = sphi 0, %s57
    %s59 = sphi 0, %s57
    %s60 = sphi 0, %s59
    %s74 = sphi 0, %s60
    %s78 = sphi 0, %s78
    %s80 = sphi 0, %s78
    %s81 = sphi 0, %s80
    %s95 = sphi 0, %s81
    %s99 = sphi 0, %s99
    %s101 = sphi 0, %s99
    %s102 = sphi 0, %s101
    %s116 = sphi 0, %s102
    %s120 = sphi 0, %s120
    %s122 = sphi 0, %s120
    %s123 = sphi 0, %s122
    %s137 = sphi 0, %s123
    %s145 = sphi 0, %s147
    %s148 = sphi 0, %s145
    %s149 = sphi 0, %s148
    %s165 = sphi 0, %s149
  $region4: #{_lambda_.8} parent=0 // loop_header_branch
    %14 = sbr.rel (%p12) target = $region8
  $region5: #{_lambda_.8} parent=0 // loop_body
    %s16 = ssub.s32 %s11, 1
    %s17 = ssub.s32 %s11, 2
    %s24 = sadd.s32 1, %s19
    %p25 = scmp.ge.s32.totalorder %s24, 4
    %s26 = scalar_select %p25, 0, %s24
    %s27 = sadd.s32 1, %s18
    %s28 = scalar_select %p25, %s27, %s18
    %p29 = scmp.ge.s32.totalorder %s28, 2
    %s30 = scalar_select %p29, 0, %s28
    %s31 = ssub.s32 %s18, %s30
    %p32 = scmp.eq.s32.totalorder %s31, 0
    %s34 = sadd.s32 %s33, 1
    %s35 = scalar_select %p32, %s33, %s34
    %p38 = pneg %p32
    %p39 = scmp.eq.s32.totalorder %s11, 7
    %p40 = por %p38, %p39
    %p41 = scmp.ne.s32.totalorder %s33, %s36
    %p42 = scmp.eq.s32.totalorder %s11, 0
    %p43 = por %p41, %p42
    %p44 = scmp.ne.s32.totalorder %s33, %s36
    %p45 = scmp.eq.s32.totalorder %s16, 7
    %p46 = por %p44, %p45
    %p47 = scmp.ne.s32.totalorder %s36, %s37
    %p48 = scmp.eq.s32.totalorder %s16, 0
    %p49 = por %p47, %p48
    %p50 = scmp.ne.s32.totalorder %s36, %s37
    %p51 = scmp.eq.s32.totalorder %s17, 7
    %p52 = por %p50, %p51
    %p54 = scmp.ne.s32.totalorder %s37, %s53
    %p55 = scmp.eq.s32.totalorder %s17, 0
    %p56 = por %p54, %p55
    %s58 = sadd.s32 %s57, 1
    %p61 = scmp.eq.s32.totalorder %s11, 7
    %p62 = scmp.ne.s32.totalorder %s57, %s59
    %p63 = scmp.eq.s32.totalorder %s11, 0
    %p64 = por %p62, %p63
    %p65 = scmp.ne.s32.totalorder %s57, %s59
    %p66 = scmp.eq.s32.totalorder %s16, 7
    %p67 = por %p65, %p66
    %p68 = scmp.ne.s32.totalorder %s59, %s60
    %p69 = scmp.eq.s32.totalorder %s16, 0
    %p70 = por %p68, %p69
    %p71 = scmp.ne.s32.totalorder %s59, %s60
    %p72 = scmp.eq.s32.totalorder %s17, 7
    %p73 = por %p71, %p72
    %p75 = scmp.ne.s32.totalorder %s60, %s74
    %p76 = scmp.eq.s32.totalorder %s17, 0
    %p77 = por %p75, %p76
    %s79 = sadd.s32 %s78, 1
    %p82 = scmp.eq.s32.totalorder %s11, 7
    %p83 = scmp.ne.s32.totalorder %s78, %s80
    %p84 = scmp.eq.s32.totalorder %s11, 0
    %p85 = por %p83, %p84
    %p86 = scmp.ne.s32.totalorder %s78, %s80
    %p87 = scmp.eq.s32.totalorder %s16, 7
    %p88 = por %p86, %p87
    %p89 = scmp.ne.s32.totalorder %s80, %s81
    %p90 = scmp.eq.s32.totalorder %s16, 0
    %p91 = por %p89, %p90
    %p92 = scmp.ne.s32.totalorder %s80, %s81
    %p93 = scmp.eq.s32.totalorder %s17, 7
    %p94 = por %p92, %p93
    %p96 = scmp.ne.s32.totalorder %s81, %s95
    %p97 = scmp.eq.s32.totalorder %s17, 0
    %p98 = por %p96, %p97
    %s100 = sadd.s32 %s99, 1
    %p103 = scmp.eq.s32.totalorder %s11, 7
    %p104 = scmp.ne.s32.totalorder %s99, %s101
    %p105 = scmp.eq.s32.totalorder %s11, 0
    %p106 = por %p104, %p105
    %p107 = scmp.ne.s32.totalorder %s99, %s101
    %p108 = scmp.eq.s32.totalorder %s16, 7
    %p109 = por %p107, %p108
    %p110 = scmp.ne.s32.totalorder %s101, %s102
    %p111 = scmp.eq.s32.totalorder %s16, 0
    %p112 = por %p110, %p111
    %p113 = scmp.ne.s32.totalorder %s101, %s102
    %p114 = scmp.eq.s32.totalorder %s17, 7
    %p115 = por %p113, %p114
    %p117 = scmp.ne.s32.totalorder %s102, %s116
    %p118 = scmp.eq.s32.totalorder %s17, 0
    %p119 = por %p117, %p118
    %s121 = sadd.s32 %s120, 1
    %p124 = scmp.eq.s32.totalorder %s11, 7
    %p125 = scmp.ne.s32.totalorder %s120, %s122
    %p126 = scmp.eq.s32.totalorder %s11, 0
    %p127 = por %p125, %p126
    %p128 = scmp.ne.s32.totalorder %s120, %s122
    %p129 = scmp.eq.s32.totalorder %s16, 7
    %p130 = por %p128, %p129
    %p131 = scmp.ne.s32.totalorder %s122, %s123
    %p132 = scmp.eq.s32.totalorder %s16, 0
    %p133 = por %p131, %p132
    %p134 = scmp.ne.s32.totalorder %s122, %s123
    %p135 = scmp.eq.s32.totalorder %s17, 7
    %p136 = por %p134, %p135
    %p138 = scmp.ne.s32.totalorder %s123, %s137
    %p139 = scmp.eq.s32.totalorder %s17, 0
    %p140 = por %p138, %p139
    %s141 = ssub.s32 %s18, %s30
    %s142 = ssub.s32 %s19, %s26
    %s143 = sor.u32 %s141, %s142
    %p144 = scmp.eq.s32.totalorder %s143, 0
    %s146 = sadd.s32 %s145, 1
    %s147 = scalar_select %p144, %s145, %s146
    %p150 = pneg %p144
    %p151 = scmp.eq.s32.totalorder %s11, 7
    %p152 = por %p150, %p151
    %p153 = scmp.ne.s32.totalorder %s145, %s148
    %p154 = scmp.eq.s32.totalorder %s11, 0
    %p155 = por %p153, %p154
    %p156 = scmp.ne.s32.totalorder %s145, %s148
    %p157 = scmp.eq.s32.totalorder %s16, 7
    %p158 = por %p156, %p157
    %p159 = scmp.ne.s32.totalorder %s148, %s149
    %p160 = scmp.eq.s32.totalorder %s16, 0
    %p161 = por %p159, %p160
    %p162 = scmp.ne.s32.totalorder %s148, %s149
    %p163 = scmp.eq.s32.totalorder %s17, 7
    %p164 = por %p162, %p163
    %p166 = scmp.ne.s32.totalorder %s149, %s165
    %p167 = scmp.eq.s32.totalorder %s17, 0
    %p168 = por %p166, %p167
    %p169 = scmp.le.s32.totalorder 1, %s11
    %p170 = scmp.lt.s32.totalorder %s11, 9
    %p171 = pnand %p169, %p170
    %p172 = pneg %p171
    // Predicated region
    $region9: #{_lambda_.8} parent=5 // pred_check
      _
    $region10: #{_lambda_.8} parent=5 // pred_check_branch
      %174 = sbr.rel (%p171) target = $region12
    $region11: #{_lambda_.8} parent=5 // pred_region
      %s175 = ssub.s32 %s11, 1
      // Predicated region
      $region13: #{_lambda_.8} parent=11 // pred_check
        %p176 = pneg %p70
      $region14: #{_lambda_.8} parent=11 // pred_check_branch
        %178 = sbr.rel (%p176) target = $region16
      $region15: #{_lambda_.8} parent=11 // pred_region
        _
      $region16: #{_lambda_.8} parent=11 // pred_fallthru
        _
      // Predicated region
      $region17: #{_lambda_.8} parent=11 // pred_check
        %p179 = pneg %p91
      $region18: #{_lambda_.8} parent=11 // pred_check_branch
        %181 = sbr.rel (%p179) target = $region20
      $region19: #{_lambda_.8} parent=11 // pred_region
        _
      $region20: #{_lambda_.8} parent=11 // pred_fallthru
        _
      // Predicated region
      $region21: #{_lambda_.8} parent=11 // pred_check
        %p182 = pneg %p112
      $region22: #{_lambda_.8} parent=11 // pred_check_branch
        %184 = sbr.rel (%p182) target = $region24
      $region23: #{_lambda_.8} parent=11 // pred_region
        _
      $region24: #{_lambda_.8} parent=11 // pred_fallthru
        _
      // Predicated region
      $region25: #{_lambda_.8} parent=11 // pred_check
        %p185 = pneg %p133
      $region26: #{_lambda_.8} parent=11 // pred_check_branch
        %187 = sbr.rel (%p185) target = $region28
      $region27: #{_lambda_.8} parent=11 // pred_region
        _
      $region28: #{_lambda_.8} parent=11 // pred_fallthru
        _
    $region12: #{_lambda_.8} parent=5 // pred_fallthru
      _
    %p188 = scmp.lt.s32.totalorder %s11, 8
    // Predicated region
    $region29: #{_lambda_.8} parent=5 // pred_check
      %p189 = pneg %p188
    $region30: #{_lambda_.8} parent=5 // pred_check_branch
      %191 = sbr.rel (%p189) target = $region32
    $region31: #{_lambda_.8} parent=5 // pred_region
      // Predicated region
      $region33: #{_lambda_.8} parent=31 // pred_check
        %p192 = pneg %p43
      $region34: #{_lambda_.8} parent=31 // pred_check_branch
        %194 = sbr.rel (%p192) target = $region36
      $region35: #{_lambda_.8} parent=31 // pred_region
        %p195 = scmp.lt.s32.totalorder %s18, 1
        %s196 = scalar_select %p195, %s18, 1
        %s197 = smul.addr %s196, 6
        %s198 = smul.addr %s197, 4
        %s199 = scalar_lea.vmem %s0, %s198
      $region36: #{_lambda_.8} parent=31 // pred_fallthru
        _
    $region32: #{_lambda_.8} parent=5 // pred_fallthru
      _
    %p200 = scmp.le.s32.totalorder 1, %s11
    %p201 = scmp.lt.s32.totalorder %s11, 9
    %p202 = pnand %p200, %p201
    %p203 = pneg %p202
    // Predicated region
    $region37: #{_lambda_.8} parent=5 // pred_check
      _
    $region38: #{_lambda_.8} parent=5 // pred_check_branch
      %205 = sbr.rel (%p202) target = $region40
    $region39: #{_lambda_.8} parent=5 // pred_region
      %s206 = ssub.s32 %s11, 1
      %p207 = scmp.lt.s32.totalorder %s20, 1
      %s208 = scalar_select %p207, %s20, 1
      %s209 = smul.addr %s208, 6
      %s210 = smul.addr %s209, 4
      %s211 = scalar_lea.vmem %s0, %s210
      %p212 = pneg %p49
      %p213 = pneg %p46
      %p214 = pneg %p70
      %p215 = pneg %p67
      %p216 = pneg %p91
      %p217 = pneg %p88
      %p218 = pneg %p112
      %p219 = pneg %p109
      %p220 = pneg %p133
      %p221 = pneg %p130
      %p222 = pneg %p161
      %p223 = pneg %p158
      %p224 = scmp.lt.s32.totalorder %s20, 1
      %s225 = scalar_select %p224, %s20, 1
      %p226 = scmp.lt.s32.totalorder %s21, 3
      %s227 = scalar_select %p226, %s21, 3
      %s228 = smul.addr %s225, 4
      %s229 = sadd.s32 %s227, %s228
      %s230 = smul.addr %s229, 2
      %s231 = scalar_lea.vmem %s5, %s230
      %p232 = scmp.lt.s32.totalorder %s20, 1
      %s233 = scalar_select %p232, %s20, 1
      %s234 = smul.addr %s233, 6
      %s235 = smul.addr %s234, 4
      %s236 = scalar_lea.vmem %s0, %s235
      %p237 = scmp.lt.s32.totalorder %s20, 1
      %s238 = scalar_select %p237, %s20, 1
      %p239 = scmp.lt.s32.totalorder %s21, 3
      %s240 = scalar_select %p239, %s21, 3
      %s241 = smul.addr %s238, 4
      %s242 = sadd.s32 %s240, %s241
      %s243 = smul.addr %s242, 2
      %s244 = scalar_lea.vmem %s5, %s243
      %v246 = vld [vmem:[%s1] sm:$0xf]
      %v247 = vld [vmem:[%s1 + $0x4] sm:$0x1]
      %v248 = vunpack.c.l.bf16 %v246
      %v249 = vunpack.c.l.bf16 %v247
      %s250 = smul.addr %s21, 4
      %s251 = scalar_lea.vmem %s236, %s250
      %v252 = vld [vmem:[%s251] sm:$0x7]
      %v253 = vunpack.c.l.bf16 %v252
      %v254 = vlaneseq
      %v255 = vshrl.u32 %v254, 7
      %v256 = vsub.s32 0, %v255
      %v257 = vrot.slane %v248, %v256
      %v258 = vmul.f32 %v253, %v257
      %v259 = vadd.f32 %v258, 0.0
      %v260 = vlaneseq
      %v261 = vshrl.u32 %v260, 7
      %v262 = vsub.s32 1, %v261
      %v263 = vrot.slane %v248, %v262
      %v264 = vmul.f32 %v253, %v263
      %v266 = vrot.slane %v264, 1
      %v268 = vadd.f32 %v259, %v266
      %v269 = vlaneseq
      %v270 = vshrl.u32 %v269, 7
      %v271 = vsub.s32 2, %v270
      %v272 = vrot.slane %v248, %v271
      %v273 = vmul.f32 %v253, %v272
      %v275 = vrot.slane %v273, 2
      %v277 = vadd.f32 %v268, %v275
      %s278 = sadd.s32 %s21, 1
      %s279 = smul.addr %s278, 4
      %s280 = scalar_lea.vmem %s236, %s279
      %v281 = vld [vmem:[%s280] sm:$0x7]
      %v282 = vunpack.c.l.bf16 %v281
      %v283 = vlaneseq
      %v284 = vshrl.u32 %v283, 7
      %v285 = vsub.s32 3, %v284
      %v286 = vrot.slane %v248, %v285
      %v287 = vmul.f32 %v282, %v286
      %v288 = vadd.f32 %v277, %v287
      %v289 = vlaneseq
      %v290 = vshrl.u32 %v289, 7
      %v291 = vsub.s32 4, %v290
      %v292 = vrot.slane %v248, %v291
      %v293 = vmul.f32 %v282, %v292
      %v295 = vrot.slane %v293, 1
      %v297 = vadd.f32 %v288, %v295
      %v298 = vlaneseq
      %v299 = vshrl.u32 %v298, 7
      %v300 = vsub.s32 5, %v299
      %v301 = vrot.slane %v248, %v300
      %v302 = vmul.f32 %v282, %v301
      %v304 = vrot.slane %v302, 2
      %v306 = vadd.f32 %v297, %v304
      %s307 = sadd.s32 %s21, 2
      %s308 = smul.addr %s307, 4
      %s309 = scalar_lea.vmem %s236, %s308
      %v310 = vld [vmem:[%s309] sm:$0x7]
      %v311 = vunpack.c.l.bf16 %v310
      %v312 = vlaneseq
      %v313 = vshrl.u32 %v312, 7
      %v314 = vsub.s32 6, %v313
      %v315 = vrot.slane %v248, %v314
      %v316 = vmul.f32 %v311, %v315
      %v317 = vadd.f32 %v306, %v316
      %v318 = vlaneseq
      %v319 = vshrl.u32 %v318, 7
      %v320 = vsub.s32 7, %v319
      %v321 = vrot.slane %v248, %v320
      %v322 = vmul.f32 %v311, %v321
      %v324 = vrot.slane %v322, 1
      %v326 = vadd.f32 %v317, %v324
      %v327 = vlaneseq
      %v328 = vshrl.u32 %v327, 7
      %v329 = vsub.s32 0, %v328
      %v330 = vrot.slane %v249, %v329
      %v331 = vmul.f32 %v311, %v330
      %v333 = vrot.slane %v331, 2
      %v335 = vadd.f32 %v326, %v333
      %v336 = vld [vmem:[%s2] sm:$0x1]
      %v338 = vlaneseq
      %v339 = vshrl.u32 %v338, 7
      %v340 = vsub.s32 0, %v339
      %v341 = vrot.slane %v336, %v340
      %v343 = vadd.f32 %v335, %v341
      %v344 = vmax.f32 %v343, 0.0
      %v345 = vpack.c.bf16 %v344, %v344
      %v346 = vld [vmem:[%s3] sm:$0xf]
      %v347 = vld [vmem:[%s3 + $0x4] sm:$0xf]
      %v348 = vld [vmem:[%s3 + $0x8] sm:$0xf]
      %v349 = vld [vmem:[%s3 + $0xc] sm:$0xf]
      %v350 = vld [vmem:[%s4] sm:$0x1]
      %v352 = vlaneseq
      %v353 = vshrl.u32 %v352, 7
      %v354 = vsub.s32 0, %v353
      %v355 = vrot.slane %v350, %v354
      %v361 = vunpack.c.l.b16 %v346
      %v362 = vunpack.c.l.b16 %v347
      %v363 = vunpack.c.l.b16 %v348
      %v364 = vunpack.c.l.b16 %v349
      %v365 = vpack.c.b16 %v362, %v361
      %v366 = vpack.c.b16 %v364, %v363
      %vm369 = vcmask 261120
      %v371 = vsel %vm369, %v345, 0
      %373 = vmatprep.subr.bf16.mxu0 0
      %374 = vmatpush1.bf16.msra.mxu0 %v365
      %375 = vmatprep.subr.bf16.mxu0 0
      %376 = vmatpush1.bf16.msra.mxu0 %v366
      %377 = vmatprep.subr.bf16.mxu0 0
      %378 = vmatpush1.bf16.msra.mxu0 0
      %379 = vmatprep.subr.bf16.mxu0 0
      %380 = vmatpush1.bf16.msra.mxu0 0
      %381 = vmatprep.subr.bf16.mxu0 0
      %382 = vmatpush1.bf16.msra.mxu0 0
      %383 = vmatprep.subr.bf16.mxu0 0
      %384 = vmatpush1.bf16.msra.mxu0 0
      %385 = vmatprep.subr.bf16.mxu0 0
      %386 = vmatpush1.bf16.msra.mxu0 0
      %387 = vmatprep.subr.bf16.mxu0 0
      %388 = vmatpush1.bf16.msra.mxu0 0
      %389 = vmatprep.subr.bf16.mxu0 0
      %390 = vmatpush1.bf16.msra.mxu0 0
      %391 = vmatprep.subr.bf16.mxu0 0
      %392 = vmatpush1.bf16.msra.mxu0 0
      %393 = vmatprep.subr.bf16.mxu0 0
      %394 = vmatpush1.bf16.msra.mxu0 0
      %395 = vmatprep.subr.bf16.mxu0 0
      %396 = vmatpush1.bf16.msra.mxu0 0
      %397 = vmatprep.subr.bf16.mxu0 0
      %398 = vmatpush1.bf16.msra.mxu0 0
      %399 = vmatprep.subr.bf16.mxu0 0
      %400 = vmatpush1.bf16.msra.mxu0 0
      %401 = vmatprep.subr.bf16.mxu0 0
      %402 = vmatpush1.bf16.msra.mxu0 0
      %403 = vmatprep.subr.bf16.mxu0 0
      %404 = vmatpush1.bf16.msra.mxu0 0
      %405 = vmatprep.mubr.bf16.mxu0 0
      %406 = vmatmul.mubr.bf16.gmra.mrb[0].mxu0 %v371
      %v407 = vpop.f32.mrb[0].mxu0
      %v408 = vadd.f32 %v355, %v407
      %v409 = vpop.f32.mrb[0].mxu0
      %v410 = vpop.f32.mrb[0].mxu0
      %v411 = vpop.f32.mrb[0].mxu0
      %412 = vdwg.mxu0
      %v413 = vmax.f32 %v408, 0.0
      %v414 = vpack.c.bf16 %v413, %v413
      %vm415 = vcmask 254976
      %416 = vst.msk [vmem:[%s244] sm:$0x3] %vm415, %v414
      %p417 = scmp.lt.s32.totalorder %s20, 1
      %s418 = scalar_select %p417, %s20, 1
      %p419 = scmp.lt.s32.totalorder %s21, 3
      %s420 = scalar_select %p419, %s21, 3
      %s421 = smul.addr %s418, 4
      %s422 = sadd.s32 %s420, %s421
      %s423 = smul.addr %s422, 2
      %s424 = scalar_lea.vmem %s5, %s423
      // Predicated region
      $region41: #{_lambda_.8} parent=39 // pred_check
        %p425 = pneg %p158
      $region42: #{_lambda_.8} parent=39 // pred_check_branch
        %427 = sbr.rel (%p425) target = $region44
      $region43: #{_lambda_.8} parent=39 // pred_region
        _
      $region44: #{_lambda_.8} parent=39 // pred_fallthru
        _
    $region40: #{_lambda_.8} parent=5 // pred_fallthru
      _
    %p428 = scmp.le.s32.totalorder 2, %s11
    // Predicated region
    $region45: #{_lambda_.8} parent=5 // pred_check
      %p429 = pneg %p428
    $region46: #{_lambda_.8} parent=5 // pred_check_branch
      %431 = sbr.rel (%p429) target = $region48
    $region47: #{_lambda_.8} parent=5 // pred_region
      %s432 = ssub.s32 %s11, 2
      // Predicated region
      $region49: #{_lambda_.8} parent=47 // pred_check
        %p433 = pneg %p164
      $region50: #{_lambda_.8} parent=47 // pred_check_branch
        %435 = sbr.rel (%p433) target = $region52
      $region51: #{_lambda_.8} parent=47 // pred_region
        %p436 = scmp.lt.s32.totalorder %s22, 1
        %s437 = scalar_select %p436, %s22, 1
        %p438 = scmp.lt.s32.totalorder %s23, 3
        %s439 = scalar_select %p438, %s23, 3
        %s440 = smul.addr %s437, 4
        %s441 = sadd.s32 %s439, %s440
        %s442 = smul.addr %s441, 2
        %s443 = scalar_lea.vmem %s5, %s442
      $region52: #{_lambda_.8} parent=47 // pred_fallthru
        _
    $region48: #{_lambda_.8} parent=5 // pred_fallthru
      _
  $region6: #{_lambda_.8} parent=0 // loop_footer
    %s15 = sadd.s32 1, %s11
  $region7: #{_lambda_.8} parent=0 // loop_footer_branch
    %10 = sbr.rel target = $region3
  $region8: #{_lambda_.8} parent=0 // loop_exit
    _

// kernel: _lambda_.9
$region0: #{_lambda_.9}
  #allocation0 [shape = 'u32[]', space=smem, size = 0x4, offset = 0x4, fixed_abs, tag = 'smem constant byte address 0x4 - core index']
  #allocation1 [shape = 'u32[144,128]{1,0:T(1,128)}', space=vmem, size = 0x12000, scoped, tag = 'internal scratch']
  %s0 = inlined_call_operand.vmem [shape: bf16[8,6,6,32], index: 0, kind: input, shape index: {}]
  %s1 = inlined_call_operand.vmem [shape: bf16[9,32], index: 1, kind: input, shape index: {}]
  %s2 = inlined_call_operand.vmem [shape: f32[1,32], index: 2, kind: input, shape index: {}]
  %s3 = inlined_call_operand.vmem [shape: bf16[32,64], index: 3, kind: input, shape index: {}]
  %s4 = inlined_call_operand.vmem [shape: f32[1,64], index: 4, kind: input, shape index: {}]
  %s5 = inlined_call_operand.vmem [shape: bf16[2,5,5,64], index: 5, kind: output, shape index: {}]
  %s6 = sld [smem:[#allocation0]]
  $region53: #{_lambda_.9} parent=0
    _
  %s8 = ssub.s32 1, %s6
  %s9 = scalar_select 0, %s8, %s6
  loop: start=0, step=1, limit=12
  $region2: #{_lambda_.9} parent=0 // loop_pre_header
    _
  $region3: #{_lambda_.9} parent=0 // loop_header
    %s11 = sphi 0, %s15
    %p12 = scmp.ge.s32.totalorder %s11, 12
    %s18 = sphi 0, %s30
    %s19 = sphi 0, %s26
    %s20 = sphi 0, %s18
    %s21 = sphi 0, %s19
    %s22 = sphi 0, %s20
    %s23 = sphi 0, %s21
    %s33 = sphi 0, %s35
    %s36 = sphi 0, %s33
    %s37 = sphi 0, %s36
    %s53 = sphi 0, %s37
    %s57 = sphi 0, %s57
    %s59 = sphi 0, %s57
    %s60 = sphi 0, %s59
    %s74 = sphi 0, %s60
    %s78 = sphi 0, %s78
    %s80 = sphi 0, %s78
    %s81 = sphi 0, %s80
    %s95 = sphi 0, %s81
    %s99 = sphi 0, %s99
    %s101 = sphi 0, %s99
    %s102 = sphi 0, %s101
    %s116 = sphi 0, %s102
    %s120 = sphi 0, %s120
    %s122 = sphi 0, %s120
    %s123 = sphi 0, %s122
    %s137 = sphi 0, %s123
    %s145 = sphi 0, %s147
    %s148 = sphi 0, %s145
    %s149 = sphi 0, %s148
    %s165 = sphi 0, %s149
  $region4: #{_lambda_.9} parent=0 // loop_header_branch
    %14 = sbr.rel (%p12) target = $region8
  $region5: #{_lambda_.9} parent=0 // loop_body
    %s16 = ssub.s32 %s11, 1
    %s17 = ssub.s32 %s11, 2
    %s24 = sadd.s32 1, %s19
    %p25 = scmp.ge.s32.totalorder %s24, 5
    %s26 = scalar_select %p25, 0, %s24
    %s27 = sadd.s32 1, %s18
    %s28 = scalar_select %p25, %s27, %s18
    %p29 = scmp.ge.s32.totalorder %s28, 2
    %s30 = scalar_select %p29, 0, %s28
    %s31 = ssub.s32 %s18, %s30
    %p32 = scmp.eq.s32.totalorder %s31, 0
    %s34 = sadd.s32 %s33, 1
    %s35 = scalar_select %p32, %s33, %s34
    %p38 = pneg %p32
    %p39 = scmp.eq.s32.totalorder %s11, 9
    %p40 = por %p38, %p39
    %p41 = scmp.ne.s32.totalorder %s33, %s36
    %p42 = scmp.eq.s32.totalorder %s11, 0
    %p43 = por %p41, %p42
    %p44 = scmp.ne.s32.totalorder %s33, %s36
    %p45 = scmp.eq.s32.totalorder %s16, 9
    %p46 = por %p44, %p45
    %p47 = scmp.ne.s32.totalorder %s36, %s37
    %p48 = scmp.eq.s32.totalorder %s16, 0
    %p49 = por %p47, %p48
    %p50 = scmp.ne.s32.totalorder %s36, %s37
    %p51 = scmp.eq.s32.totalorder %s17, 9
    %p52 = por %p50, %p51
    %p54 = scmp.ne.s32.totalorder %s37, %s53
    %p55 = scmp.eq.s32.totalorder %s17, 0
    %p56 = por %p54, %p55
    %s58 = sadd.s32 %s57, 1
    %p61 = scmp.eq.s32.totalorder %s11, 9
    %p62 = scmp.ne.s32.totalorder %s57, %s59
    %p63 = scmp.eq.s32.totalorder %s11, 0
    %p64 = por %p62, %p63
    %p65 = scmp.ne.s32.totalorder %s57, %s59
    %p66 = scmp.eq.s32.totalorder %s16, 9
    %p67 = por %p65, %p66
    %p68 = scmp.ne.s32.totalorder %s59, %s60
    %p69 = scmp.eq.s32.totalorder %s16, 0
    %p70 = por %p68, %p69
    %p71 = scmp.ne.s32.totalorder %s59, %s60
    %p72 = scmp.eq.s32.totalorder %s17, 9
    %p73 = por %p71, %p72
    %p75 = scmp.ne.s32.totalorder %s60, %s74
    %p76 = scmp.eq.s32.totalorder %s17, 0
    %p77 = por %p75, %p76
    %s79 = sadd.s32 %s78, 1
    %p82 = scmp.eq.s32.totalorder %s11, 9
    %p83 = scmp.ne.s32.totalorder %s78, %s80
    %p84 = scmp.eq.s32.totalorder %s11, 0
    %p85 = por %p83, %p84
    %p86 = scmp.ne.s32.totalorder %s78, %s80
    %p87 = scmp.eq.s32.totalorder %s16, 9
    %p88 = por %p86, %p87
    %p89 = scmp.ne.s32.totalorder %s80, %s81
    %p90 = scmp.eq.s32.totalorder %s16, 0
    %p91 = por %p89, %p90
    %p92 = scmp.ne.s32.totalorder %s80, %s81
    %p93 = scmp.eq.s32.totalorder %s17, 9
    %p94 = por %p92, %p93
    %p96 = scmp.ne.s32.totalorder %s81, %s95
    %p97 = scmp.eq.s32.totalorder %s17, 0
    %p98 = por %p96, %p97
    %s100 = sadd.s32 %s99, 1
    %p103 = scmp.eq.s32.totalorder %s11, 9
    %p104 = scmp.ne.s32.totalorder %s99, %s101
    %p105 = scmp.eq.s32.totalorder %s11, 0
    %p106 = por %p104, %p105
    %p107 = scmp.ne.s32.totalorder %s99, %s101
    %p108 = scmp.eq.s32.totalorder %s16, 9
    %p109 = por %p107, %p108
    %p110 = scmp.ne.s32.totalorder %s101, %s102
    %p111 = scmp.eq.s32.totalorder %s16, 0
    %p112 = por %p110, %p111
    %p113 = scmp.ne.s32.totalorder %s101, %s102
    %p114 = scmp.eq.s32.totalorder %s17, 9
    %p115 = por %p113, %p114
    %p117 = scmp.ne.s32.totalorder %s102, %s116
    %p118 = scmp.eq.s32.totalorder %s17, 0
    %p119 = por %p117, %p118
    %s121 = sadd.s32 %s120, 1
    %p124 = scmp.eq.s32.totalorder %s11, 9
    %p125 = scmp.ne.s32.totalorder %s120, %s122
    %p126 = scmp.eq.s32.totalorder %s11, 0
    %p127 = por %p125, %p126
    %p128 = scmp.ne.s32.totalorder %s120, %s122
    %p129 = scmp.eq.s32.totalorder %s16, 9
    %p130 = por %p128, %p129
    %p131 = scmp.ne.s32.totalorder %s122, %s123
    %p132 = scmp.eq.s32.totalorder %s16, 0
    %p133 = por %p131, %p132
    %p134 = scmp.ne.s32.totalorder %s122, %s123
    %p135 = scmp.eq.s32.totalorder %s17, 9
    %p136 = por %p134, %p135
    %p138 = scmp.ne.s32.totalorder %s123, %s137
    %p139 = scmp.eq.s32.totalorder %s17, 0
    %p140 = por %p138, %p139
    %s141 = ssub.s32 %s18, %s30
    %s142 = ssub.s32 %s19, %s26
    %s143 = sor.u32 %s141, %s142
    %p144 = scmp.eq.s32.totalorder %s143, 0
    %s146 = sadd.s32 %s145, 1
    %s147 = scalar_select %p144, %s145, %s146
    %p150 = pneg %p144
    %p151 = scmp.eq.s32.totalorder %s11, 9
    %p152 = por %p150, %p151
    %p153 = scmp.ne.s32.totalorder %s145, %s148
    %p154 = scmp.eq.s32.totalorder %s11, 0
    %p155 = por %p153, %p154
    %p156 = scmp.ne.s32.totalorder %s145, %s148
    %p157 = scmp.eq.s32.totalorder %s16, 9
    %p158 = por %p156, %p157
    %p159 = scmp.ne.s32.totalorder %s148, %s149
    %p160 = scmp.eq.s32.totalorder %s16, 0
    %p161 = por %p159, %p160
    %p162 = scmp.ne.s32.totalorder %s148, %s149
    %p163 = scmp.eq.s32.totalorder %s17, 9
    %p164 = por %p162, %p163
    %p166 = scmp.ne.s32.totalorder %s149, %s165
    %p167 = scmp.eq.s32.totalorder %s17, 0
    %p168 = por %p166, %p167
    %p169 = scmp.le.s32.totalorder 1, %s11
    %p170 = scmp.lt.s32.totalorder %s11, 11
    %p171 = pnand %p169, %p170
    %p172 = pneg %p171
    // Predicated region
    $region9: #{_lambda_.9} parent=5 // pred_check
      _
    $region10: #{_lambda_.9} parent=5 // pred_check_branch
      %174 = sbr.rel (%p171) target = $region12
    $region11: #{_lambda_.9} parent=5 // pred_region
      %s175 = ssub.s32 %s11, 1
      // Predicated region
      $region13: #{_lambda_.9} parent=11 // pred_check
        %p176 = pneg %p70
      $region14: #{_lambda_.9} parent=11 // pred_check_branch
        %178 = sbr.rel (%p176) target = $region16
      $region15: #{_lambda_.9} parent=11 // pred_region
        _
      $region16: #{_lambda_.9} parent=11 // pred_fallthru
        _
      // Predicated region
      $region17: #{_lambda_.9} parent=11 // pred_check
        %p179 = pneg %p91
      $region18: #{_lambda_.9} parent=11 // pred_check_branch
        %181 = sbr.rel (%p179) target = $region20
      $region19: #{_lambda_.9} parent=11 // pred_region
        _
      $region20: #{_lambda_.9} parent=11 // pred_fallthru
        _
      // Predicated region
      $region21: #{_lambda_.9} parent=11 // pred_check
        %p182 = pneg %p112
      $region22: #{_lambda_.9} parent=11 // pred_check_branch
        %184 = sbr.rel (%p182) target = $region24
      $region23: #{_lambda_.9} parent=11 // pred_region
        _
      $region24: #{_lambda_.9} parent=11 // pred_fallthru
        _
      // Predicated region
      $region25: #{_lambda_.9} parent=11 // pred_check
        %p185 = pneg %p133
      $region26: #{_lambda_.9} parent=11 // pred_check_branch
        %187 = sbr.rel (%p185) target = $region28
      $region27: #{_lambda_.9} parent=11 // pred_region
        _
      $region28: #{_lambda_.9} parent=11 // pred_fallthru
        _
    $region12: #{_lambda_.9} parent=5 // pred_fallthru
      _
    %p188 = scmp.lt.s32.totalorder %s11, 10
    // Predicated region
    $region29: #{_lambda_.9} parent=5 // pred_check
      %p189 = pneg %p188
    $region30: #{_lambda_.9} parent=5 // pred_check_branch
      %191 = sbr.rel (%p189) target = $region32
    $region31: #{_lambda_.9} parent=5 // pred_region
      // Predicated region
      $region33: #{_lambda_.9} parent=31 // pred_check
        %p192 = pneg %p43
      $region34: #{_lambda_.9} parent=31 // pred_check_branch
        %194 = sbr.rel (%p192) target = $region36
      $region35: #{_lambda_.9} parent=31 // pred_region
        %s195 = smul.u32 4, %s18
        %p196 = scmp.lt.s32.totalorder %s195, 7
        %s197 = scalar_select %p196, %s195, 7
        %s198 = smul.addr %s197, 6
        %s199 = smul.addr %s198, 4
        %s200 = scalar_lea.vmem %s0, %s199
        %s201 = smul.u32 4, %s18
      $region36: #{_lambda_.9} parent=31 // pred_fallthru
        _
    $region32: #{_lambda_.9} parent=5 // pred_fallthru
      _
    %p202 = scmp.le.s32.totalorder 1, %s11
    %p203 = scmp.lt.s32.totalorder %s11, 11
    %p204 = pnand %p202, %p203
    %p205 = pneg %p204
    // Predicated region
    $region37: #{_lambda_.9} parent=5 // pred_check
      _
    $region38: #{_lambda_.9} parent=5 // pred_check_branch
      %207 = sbr.rel (%p204) target = $region40
    $region39: #{_lambda_.9} parent=5 // pred_region
      %s208 = ssub.s32 %s11, 1
      %s209 = smul.u32 4, %s20
      %p210 = scmp.lt.s32.totalorder %s209, 7
      %s211 = scalar_select %p210, %s209, 7
      %s212 = smul.addr %s211, 6
      %s213 = smul.addr %s212, 4
      %s214 = scalar_lea.vmem %s0, %s213
      %p215 = pneg %p49
      %p216 = pneg %p46
      %p217 = pneg %p70
      %p218 = pneg %p67
      %p219 = pneg %p91
      %p220 = pneg %p88
      %p221 = pneg %p112
      %p222 = pneg %p109
      %p223 = pneg %p133
      %p224 = pneg %p130
      %p225 = pneg %p161
      %p226 = pneg %p158
      %p227 = scmp.lt.s32.totalorder %s20, 1
      %s228 = scalar_select %p227, %s20, 1
      %p229 = scmp.lt.s32.totalorder %s21, 4
      %s230 = scalar_select %p229, %s21, 4
      %s231 = smul.addr %s228, 5
      %s232 = sadd.s32 %s230, %s231
      %s233 = smul.addr %s232, 4
      %s234 = scalar_lea.vmem %s5, %s233
      %s235 = smul.u32 4, %s20
      %p236 = scmp.lt.s32.totalorder %s235, 7
      %s237 = scalar_select %p236, %s235, 7
      %s238 = smul.addr %s237, 6
      %s239 = smul.addr %s238, 4
      %s240 = scalar_lea.vmem %s0, %s239
      %s241 = smul.u32 4, %s20
      %p242 = scmp.lt.s32.totalorder %s20, 1
      %s243 = scalar_select %p242, %s20, 1
      %p244 = scmp.lt.s32.totalorder %s21, 4
      %s245 = scalar_select %p244, %s21, 4
      %s246 = smul.addr %s243, 5
      %s247 = sadd.s32 %s245, %s246
      %s248 = smul.addr %s247, 4
      %s249 = scalar_lea.vmem %s5, %s248
      %v251 = vld [vmem:[%s1] sm:$0xf]
      %v252 = vld [vmem:[%s1 + $0x4] sm:$0x1]
      %v253 = vunpack.c.l.bf16 %v251
      %v254 = vunpack.c.l.bf16 %v252
      %s255 = smul.addr %s21, 4
      %s256 = scalar_lea.vmem %s240, %s255
      %v257 = vld [vmem:[%s256] sm:$0x7]
      %v258 = vunpack.c.l.bf16 %v257
      %s259 = sadd.s32 %s21, 6
      %s260 = smul.addr %s259, 4
      %s261 = scalar_lea.vmem %s240, %s260
      %v262 = vld [vmem:[%s261] sm:$0x7]
      %v263 = vunpack.c.l.bf16 %v262
      %v264 = vlaneseq
      %v265 = vshrl.u32 %v264, 7
      %v266 = vsub.s32 0, %v265
      %v267 = vrot.slane %v253, %v266
      %v268 = vmul.f32 %v258, %v267
      %v269 = vadd.f32 %v268, 0.0
      %v270 = vlaneseq
      %v271 = vshrl.u32 %v270, 7
      %v272 = vsub.s32 1, %v271
      %v273 = vrot.slane %v253, %v272
      %v274 = vmul.f32 %v263, %v273
      %v275 = vadd.f32 %v269, %v274
      %v276 = vlaneseq
      %v277 = vshrl.u32 %v276, 7
      %v278 = vsub.s32 2, %v277
      %v279 = vrot.slane %v253, %v278
      %v280 = vmul.f32 %v258, %v279
      %v282 = vrot.slane %v280, 1
      %v284 = vadd.f32 %v275, %v282
      %s285 = sadd.s32 %s21, 12
      %s286 = smul.addr %s285, 4
      %s287 = scalar_lea.vmem %s240, %s286
      %v288 = vld [vmem:[%s287] sm:$0x7]
      %v289 = vunpack.c.l.bf16 %v288
      %s290 = sadd.s32 %s21, 18
      %s291 = smul.addr %s290, 4
      %s292 = scalar_lea.vmem %s240, %s291
      %v293 = vld [vmem:[%s292] sm:$0x7]
      %v294 = vunpack.c.l.bf16 %v293
      %v295 = vlaneseq
      %v296 = vshrl.u32 %v295, 7
      %v297 = vsub.s32 3, %v296
      %v298 = vrot.slane %v253, %v297
      %v299 = vmul.f32 %v289, %v298
      %v300 = vadd.f32 %v284, %v299
      %v301 = vlaneseq
      %v302 = vshrl.u32 %v301, 7
      %v303 = vsub.s32 4, %v302
      %v304 = vrot.slane %v253, %v303
      %v305 = vmul.f32 %v294, %v304
      %v306 = vadd.f32 %v300, %v305
      %v307 = vlaneseq
      %v308 = vshrl.u32 %v307, 7
      %v309 = vsub.s32 5, %v308
      %v310 = vrot.slane %v253, %v309
      %v311 = vmul.f32 %v289, %v310
      %v313 = vrot.slane %v311, 1
      %v315 = vadd.f32 %v306, %v313
      %s316 = sadd.s32 %s21, 1
      %s317 = smul.addr %s316, 4
      %s318 = scalar_lea.vmem %s240, %s317
      %v319 = vld [vmem:[%s318] sm:$0x7]
      %v320 = vunpack.c.l.bf16 %v319
      %s321 = sadd.s32 %s316, 6
      %s322 = smul.addr %s321, 4
      %s323 = scalar_lea.vmem %s240, %s322
      %v324 = vld [vmem:[%s323] sm:$0x7]
      %v325 = vunpack.c.l.bf16 %v324
      %v326 = vlaneseq
      %v327 = vshrl.u32 %v326, 7
      %v328 = vsub.s32 6, %v327
      %v329 = vrot.slane %v253, %v328
      %v330 = vmul.f32 %v320, %v329
      %v331 = vadd.f32 %v315, %v330
      %v332 = vlaneseq
      %v333 = vshrl.u32 %v332, 7
      %v334 = vsub.s32 7, %v333
      %v335 = vrot.slane %v253, %v334
      %v336 = vmul.f32 %v325, %v335
      %v337 = vadd.f32 %v331, %v336
      %v338 = vlaneseq
      %v339 = vshrl.u32 %v338, 7
      %v340 = vsub.s32 0, %v339
      %v341 = vrot.slane %v254, %v340
      %v342 = vmul.f32 %v320, %v341
      %v344 = vrot.slane %v342, 1
      %v346 = vadd.f32 %v337, %v344
      %v347 = vld [vmem:[%s2] sm:$0x1]
      %v349 = vlaneseq
      %v350 = vshrl.u32 %v349, 7
      %v351 = vsub.s32 0, %v350
      %v352 = vrot.slane %v347, %v351
      %v354 = vadd.f32 %v346, %v352
      %v355 = vmax.f32 %v354, 0.0
      %v356 = vpack.c.bf16 %v355, %v355
      %v357 = vld [vmem:[%s3] sm:$0xf]
      %v358 = vld [vmem:[%s3 + $0x4] sm:$0xf]
      %v359 = vld [vmem:[%s3 + $0x8] sm:$0xf]
      %v360 = vld [vmem:[%s3 + $0xc] sm:$0xf]
      %v361 = vld [vmem:[%s4] sm:$0x1]
      %v363 = vlaneseq
      %v364 = vshrl.u32 %v363, 7
      %v365 = vsub.s32 0, %v364
      %v366 = vrot.slane %v361, %v365
      %v372 = vunpack.c.l.b16 %v357
      %v373 = vunpack.c.l.b16 %v358
      %v374 = vunpack.c.l.b16 %v359
      %v375 = vunpack.c.l.b16 %v360
      %v376 = vpack.c.b16 %v373, %v372
      %v377 = vpack.c.b16 %v375, %v374
      %vm380 = vcmask 261120
      %v382 = vsel %vm380, %v356, 0
      %384 = vmatprep.subr.bf16.mxu0 0
      %385 = vmatpush1.bf16.msra.mxu0 %v376
      %386 = vmatprep.subr.bf16.mxu0 0
      %387 = vmatpush1.bf16.msra.mxu0 %v377
      %388 = vmatprep.subr.bf16.mxu0 0
      %389 = vmatpush1.bf16.msra.mxu0 0
      %390 = vmatprep.subr.bf16.mxu0 0
      %391 = vmatpush1.bf16.msra.mxu0 0
      %392 = vmatprep.subr.bf16.mxu0 0
      %393 = vmatpush1.bf16.msra.mxu0 0
      %394 = vmatprep.subr.bf16.mxu0 0
      %395 = vmatpush1.bf16.msra.mxu0 0
      %396 = vmatprep.subr.bf16.mxu0 0
      %397 = vmatpush1.bf16.msra.mxu0 0
      %398 = vmatprep.subr.bf16.mxu0 0
      %399 = vmatpush1.bf16.msra.mxu0 0
      %400 = vmatprep.subr.bf16.mxu0 0
      %401 = vmatpush1.bf16.msra.mxu0 0
      %402 = vmatprep.subr.bf16.mxu0 0
      %403 = vmatpush1.bf16.msra.mxu0 0
      %404 = vmatprep.subr.bf16.mxu0 0
      %405 = vmatpush1.bf16.msra.mxu0 0
      %406 = vmatprep.subr.bf16.mxu0 0
      %407 = vmatpush1.bf16.msra.mxu0 0
      %408 = vmatprep.subr.bf16.mxu0 0
      %409 = vmatpush1.bf16.msra.mxu0 0
      %410 = vmatprep.subr.bf16.mxu0 0
      %411 = vmatpush1.bf16.msra.mxu0 0
      %412 = vmatprep.subr.bf16.mxu0 0
      %413 = vmatpush1.bf16.msra.mxu0 0
      %414 = vmatprep.subr.bf16.mxu0 0
      %415 = vmatpush1.bf16.msra.mxu0 0
      %416 = vmatprep.mubr.bf16.mxu0 0
      %417 = vmatmul.mubr.bf16.gmra.mrb[0].mxu0 %v382
      %v418 = vpop.f32.mrb[0].mxu0
      %v419 = vadd.f32 %v366, %v418
      %v420 = vpop.f32.mrb[0].mxu0
      %v421 = vpop.f32.mrb[0].mxu0
      %v422 = vpop.f32.mrb[0].mxu0
      %423 = vdwg.mxu0
      %v424 = vmax.f32 %v419, 0.0
      %v425 = vpack.c.bf16 %v424, %v424
      %vm426 = vcmask 518144
      %vm427 = vsmask.f32 2304
      %vm428 = vmand %vm426, %vm427
      %v429 = vld [vmem:[%s249] sm:$0x7]
      %v430 = vsel %vm428, %v425, %v429
      %431 = vst [vmem:[%s249] sm:$0x7] %v430
      %p432 = scmp.lt.s32.totalorder %s20, 1
      %s433 = scalar_select %p432, %s20, 1
      %p434 = scmp.lt.s32.totalorder %s21, 4
      %s435 = scalar_select %p434, %s21, 4
      %s436 = smul.addr %s433, 5
      %s437 = sadd.s32 %s435, %s436
      %s438 = smul.addr %s437, 4
      %s439 = scalar_lea.vmem %s5, %s438
      // Predicated region
      $region41: #{_lambda_.9} parent=39 // pred_check
        %p440 = pneg %p158
      $region42: #{_lambda_.9} parent=39 // pred_check_branch
        %442 = sbr.rel (%p440) target = $region44
      $region43: #{_lambda_.9} parent=39 // pred_region
        _
      $region44: #{_lambda_.9} parent=39 // pred_fallthru
        _
    $region40: #{_lambda_.9} parent=5 // pred_fallthru
      _
    %p443 = scmp.le.s32.totalorder 2, %s11
    // Predicated region
    $region45: #{_lambda_.9} parent=5 // pred_check
      %p444 = pneg %p443
    $region46: #{_lambda_.9} parent=5 // pred_check_branch
      %446 = sbr.rel (%p444) target = $region48
    $region47: #{_lambda_.9} parent=5 // pred_region
      %s447 = ssub.s32 %s11, 2
      // Predicated region
      $region49: #{_lambda_.9} parent=47 // pred_check
        %p448 = pneg %p164
      $region50: #{_lambda_.9} parent=47 // pred_check_branch
        %450 = sbr.rel (%p448) target = $region52
      $region51: #{_lambda_.9} parent=47 // pred_region
        %p451 = scmp.lt.s32.totalorder %s22, 1
        %s452 = scalar_select %p451, %s22, 1
        %p453 = scmp.lt.s32.totalorder %s23, 4
        %s454 = scalar_select %p453, %s23, 4
        %s455 = smul.addr %s452, 5
        %s456 = sadd.s32 %s454, %s455
        %s457 = smul.addr %s456, 4
        %s458 = scalar_lea.vmem %s5, %s457
      $region52: #{_lambda_.9} parent=47 // pred_fallthru
        _
    $region48: #{_lambda_.9} parent=5 // pred_fallthru
      _
  $region6: #{_lambda_.9} parent=0 // loop_footer
    %s15 = sadd.s32 1, %s11
  $region7: #{_lambda_.9} parent=0 // loop_footer_branch
    %10 = sbr.rel target = $region3
  $region8: #{_lambda_.9} parent=0 // loop_exit
    _

</llo_original>
